<compile_context>
chip_gen: v5e
topology: v5e:2x2
jax: 0.10.0
libtpu: 0.0.40
codegen_flags: <defaults>
</compile_context>

<pallas_src>
import jax
import jax.numpy as jnp
from jax import lax
from jax.experimental import pallas as pl
from jax.experimental.pallas import tpu as pltpu


def _round_up(x, m):
    return ((x + m - 1) // m) * m


def _encoder_kernel(len_ref,                 # [NB, 1]  i32
                    data_ref,                # [T, NB, D] f32 (time-major)
                    wih_r_ref, wih_z_ref, wih_n_ref,   # [D, H] each
                    whh_r_ref, whh_z_ref, whh_n_ref,   # [H, H] each
                    b_r_ref, b_z_ref, b_in_ref, b_hn_ref,  # [1, H] each
                    w1_ref, b1_ref,          # [H, U], [1, U]
                    w2_ref, b2_ref,          # [U, OUT_PAD], [1, OUT_PAD]
                    out_ref,                 # [NB, OUT_PAD]
                    gi_r_scr, gi_z_scr, gi_n_scr):     # [T, NB, H] scratch
    T, NB, D = data_ref.shape
    H = whh_r_ref.shape[0]

    # ---- Hoisted input projection: one big MXU matmul per gate ------------
    x2d = data_ref[...].reshape(T * NB, D)
    gi_r_scr[...] = (jnp.dot(x2d, wih_r_ref[...],
                             preferred_element_type=jnp.float32)
                     + b_r_ref[...]).reshape(T, NB, H)
    gi_z_scr[...] = (jnp.dot(x2d, wih_z_ref[...],
                             preferred_element_type=jnp.float32)
                     + b_z_ref[...]).reshape(T, NB, H)
    gi_n_scr[...] = (jnp.dot(x2d, wih_n_ref[...],
                             preferred_element_type=jnp.float32)
                     + b_in_ref[...]).reshape(T, NB, H)

    # ---- Hoist loop-invariant loads ---------------------------------------
    lengths = len_ref[...]                   # [NB, 1] int32
    whh_r = whh_r_ref[...]
    whh_z = whh_z_ref[...]
    whh_n = whh_n_ref[...]
    b_hn = b_hn_ref[...]

    # ---- Serial GRU recurrence (only h @ W_hh per step) -------------------
    def gru_step(t, h):
        gh_r = jnp.dot(h, whh_r, preferred_element_type=jnp.float32)
        gh_z = jnp.dot(h, whh_z, preferred_element_type=jnp.float32)
        gh_n = jnp.dot(h, whh_n, preferred_element_type=jnp.float32) + b_hn
        r = jax.nn.sigmoid(gi_r_scr[t] + gh_r)
        z = jax.nn.sigmoid(gi_z_scr[t] + gh_z)
        n = jnp.tanh(gi_n_scr[t] + r * gh_n)
        h_new = (1.0 - z) * n + z * h
        # pack_padded_sequence semantics: freeze h once t >= length.
        return jnp.where(lengths > t, h_new, h)

    h0 = jnp.zeros((NB, H), dtype=jnp.float32)
    h_last = lax.fori_loop(0, T, gru_step, h0, unroll=True)   # [NB, H]

    # ---- hidden_to_z0: Linear -> Tanh -> Linear ---------------------------
    hid = jnp.tanh(jnp.dot(h_last, w1_ref[...],
                           preferred_element_type=jnp.float32) + b1_ref[...])
    out_ref[...] = (jnp.dot(hid, w2_ref[...],
                            preferred_element_type=jnp.float32) + b2_ref[...])


def encoder_z0_rnn_forward(data, time_steps, lengths, params, latent_dim):
    """data: [N, T, D] f32, time_steps: [N, T] (unused, as in the torch
    module), lengths: [N] int32.  Returns (mean, logvar), each [N, latent_dim]."""
    del time_steps  # not used by the reference forward pass
    N, T, D = data.shape
    H = latent_dim
    U = params["w1"].shape[1]
    OUT = 2 * H
    OUT_PAD = _round_up(OUT, 128)            # lane-dense output stores

    # ---- batch blocking / padding -----------------------------------------
    NB = 128 if N > 128 else _round_up(N, 8)
    N_pad = _round_up(N, NB)
    num_blocks = N_pad // NB

    data_f32 = data.astype(jnp.float32)
    if N_pad != N:
        data_f32 = jnp.pad(data_f32, ((0, N_pad - N), (0, 0), (0, 0)))
    data_tnd = jnp.transpose(data_f32, (1, 0, 2))          # [T, N_pad, D]
    len_pad = jnp.pad(lengths.astype(jnp.int32),
                      (0, N_pad - N)).reshape(N_pad, 1)    # pad rows -> len 0

    # ---- per-gate weight split + bias folding (PyTorch gate order r,z,n) ---
    w_ih = params["w_ih"].astype(jnp.float32)
    w_hh = params["w_hh"].astype(jnp.float32)
    b_ih = params["b_ih"].astype(jnp.float32)
    b_hh = params["b_hh"].astype(jnp.float32)

    wih_r, wih_z, wih_n = w_ih[:, :H], w_ih[:, H:2 * H], w_ih[:, 2 * H:]
    whh_r, whh_z, whh_n = w_hh[:, :H], w_hh[:, H:2 * H], w_hh[:, 2 * H:]
    b_r = b_ih[:, :H] + b_hh[:, :H]
    b_z = b_ih[:, H:2 * H] + b_hh[:, H:2 * H]
    b_in = b_ih[:, 2 * H:]
    b_hn = b_hh[:, 2 * H:]

    w1 = params["w1"].astype(jnp.float32)
    b1 = params["b1"].astype(jnp.float32)
    w2_pad = jnp.pad(params["w2"].astype(jnp.float32),
                     ((0, 0), (0, OUT_PAD - OUT)))
    b2_pad = jnp.pad(params["b2"].astype(jnp.float32),
                     ((0, 0), (0, OUT_PAD - OUT)))

    def full_spec(shape):
        return pl.BlockSpec(shape, lambda i, _s=shape: (0,) * len(_s))

    grid_spec = pltpu.PrefetchScalarGridSpec(
        num_scalar_prefetch=0,
        grid=(num_blocks,),
        in_specs=[
            pl.BlockSpec((NB, 1), lambda i: (i, 0)),         # lengths
            pl.BlockSpec((T, NB, D), lambda i: (0, i, 0)),   # data (time-major)
            full_spec((D, H)), full_spec((D, H)), full_spec((D, H)),
            full_spec((H, H)), full_spec((H, H)), full_spec((H, H)),
            full_spec((1, H)), full_spec((1, H)), full_spec((1, H)),
            full_spec((1, H)),
            full_spec((H, U)), full_spec((1, U)),
            full_spec((U, OUT_PAD)), full_spec((1, OUT_PAD)),
        ],
        out_specs=pl.BlockSpec((NB, OUT_PAD), lambda i: (i, 0)),
        scratch_shapes=[pltpu.VMEM((T, NB, H), jnp.float32)] * 3,
    )

    out = pl.pallas_call(
        _encoder_kernel,
        out_shape=jax.ShapeDtypeStruct((N_pad, OUT_PAD), jnp.float32),
        grid_spec=grid_spec,
        compiler_params=pltpu.CompilerParams(
            dimension_semantics=("parallel",),
            vmem_limit_bytes=32 * 1024 * 1024),
    )(len_pad, data_tnd,
      wih_r, wih_z, wih_n, whh_r, whh_z, whh_n,
      b_r, b_z, b_in, b_hn,
      w1, b1, w2_pad, b2_pad)

    mean_logvar = out[:N, :OUT]
    return mean_logvar[:, :H], mean_logvar[:, H:]


def _reference_forward(data, lengths, params, latent_dim):
    """Pure-JAX reference mirroring torch GRU + pack_padded_sequence + MLP."""
    N, T, D = data.shape
    H = latent_dim
    h = jnp.zeros((N, H), jnp.float32)
    for t in range(T):
        x_t = data[:, t, :]
        gi = x_t @ params["w_ih"] + params["b_ih"]
        gh = h @ params["w_hh"] + params["b_hh"]
        r = jax.nn.sigmoid(gi[:, :H] + gh[:, :H])
        z = jax.nn.sigmoid(gi[:, H:2 * H] + gh[:, H:2 * H])
        n = jnp.tanh(gi[:, 2 * H:] + r * gh[:, 2 * H:])
        h_new = (1.0 - z) * n + z * h
        mask = (lengths[:, None] > t).astype(jnp.float32)
        h = mask * h_new + (1.0 - mask) * h
    hid = jnp.tanh(h @ params["w1"] + params["b1"])
    out = hid @ params["w2"] + params["b2"]
    return out[:, :H], out[:, H:]


if __name__ == "__main__":
    # Small shapes consistent with the module: N batch, T steps, D input feats.
    N, T, D = 4, 8, 8
    latent_dim = 16
    hidden_to_z0_units = 20        # default in the torch module

    key = jax.random.PRNGKey(0)
    keys = jax.random.split(key, 12)

    scale = 0.1
    params = {
        # GRU weights, gate order (r, z, n) as in PyTorch; stored transposed
        # for right-multiplication: x [N,D] @ w_ih [D,3H].
        "w_ih": scale * jax.random.normal(keys[0], (D, 3 * latent_dim), jnp.float32),
        "w_hh": scale * jax.random.normal(keys[1], (latent_dim, 3 * latent_dim), jnp.float32),
        "b_ih": scale * jax.random.normal(keys[2], (1, 3 * latent_dim), jnp.float32),
        "b_hh": scale * jax.random.normal(keys[3], (1, 3 * latent_dim), jnp.float32),
        # hidden_to_z0: Linear(H -> U), Tanh, Linear(U -> 2H)
        "w1": scale * jax.random.normal(keys[4], (latent_dim, hidden_to_z0_units), jnp.float32),
        "b1": scale * jax.random.normal(keys[5], (1, hidden_to_z0_units), jnp.float32),
        "w2": scale * jax.random.normal(keys[6], (hidden_to_z0_units, 2 * latent_dim), jnp.float32),
        "b2": scale * jax.random.normal(keys[7], (1, 2 * latent_dim), jnp.float32),
    }

    data = jax.random.normal(keys[8], (N, T, D), jnp.float32)
    time_steps = jnp.broadcast_to(jnp.arange(T, dtype=jnp.float32), (N, T))
    lengths = jnp.array([8, 5, 3, 7], dtype=jnp.int32)   # variable seq lengths

    mean, logvar = encoder_z0_rnn_forward(data, time_steps, lengths, params, latent_dim)
    jax.block_until_ready((mean, logvar))

    # Sanity check against a pure-JAX reference of the same math.
    ref_mean, ref_logvar = _reference_forward(data, lengths, params, latent_dim)
    assert mean.shape == (N, latent_dim) and logvar.shape == (N, latent_dim)
    assert jnp.allclose(mean, ref_mean, atol=1e-5, rtol=1e-5)
    assert jnp.allclose(logvar, ref_logvar, atol=1e-5, rtol=1e-5)

    print("KERNEL_OK")
</pallas_src>

<mosaic_0001>
module attributes {stable_mosaic.version = 11 : i64} {
  func.func @_encoder_kernel(%arg0: i32, %arg1: memref<8x1xi32, #tpu.memory_space<vmem>>, %arg2: memref<8x8x8xf32, #tpu.memory_space<vmem>>, %arg3: memref<8x16xf32, #tpu.memory_space<vmem>>, %arg4: memref<8x16xf32, #tpu.memory_space<vmem>>, %arg5: memref<8x16xf32, #tpu.memory_space<vmem>>, %arg6: memref<16x16xf32, #tpu.memory_space<vmem>>, %arg7: memref<16x16xf32, #tpu.memory_space<vmem>>, %arg8: memref<16x16xf32, #tpu.memory_space<vmem>>, %arg9: memref<1x16xf32, #tpu.memory_space<vmem>>, %arg10: memref<1x16xf32, #tpu.memory_space<vmem>>, %arg11: memref<1x16xf32, #tpu.memory_space<vmem>>, %arg12: memref<1x16xf32, #tpu.memory_space<vmem>>, %arg13: memref<16x20xf32, #tpu.memory_space<vmem>>, %arg14: memref<1x20xf32, #tpu.memory_space<vmem>>, %arg15: memref<20x128xf32, #tpu.memory_space<vmem>>, %arg16: memref<1x128xf32, #tpu.memory_space<vmem>>, %arg17: memref<8x128xf32, #tpu.memory_space<vmem>>, %arg18: memref<8x8x16xf32, #tpu.memory_space<vmem>>, %arg19: memref<8x8x16xf32, #tpu.memory_space<vmem>>, %arg20: memref<8x8x16xf32, #tpu.memory_space<vmem>>) attributes {dimension_semantics = [#tpu.dimension_semantics<parallel>], iteration_bounds = array<i64: 1>, scalar_prefetch = 0 : i64, scratch_operands = 3 : i64, tpu.core_type = #tpu.core_type<tc>, window_params = [{transform_indices = @transform_0, window_bounds = array<i64: 8, 1>}, {transform_indices = @transform_1, window_bounds = array<i64: 8, 8, 8>}, {pipeline_mode = #tpu.pipeline_mode<synchronous>, transform_indices = @transform_2, window_bounds = array<i64: 8, 16>}, {pipeline_mode = #tpu.pipeline_mode<synchronous>, transform_indices = @transform_3, window_bounds = array<i64: 8, 16>}, {pipeline_mode = #tpu.pipeline_mode<synchronous>, transform_indices = @transform_4, window_bounds = array<i64: 8, 16>}, {pipeline_mode = #tpu.pipeline_mode<synchronous>, transform_indices = @transform_5, window_bounds = array<i64: 16, 16>}, {pipeline_mode = #tpu.pipeline_mode<synchronous>, transform_indices = @transform_6, window_bounds = array<i64: 16, 16>}, {pipeline_mode = #tpu.pipeline_mode<synchronous>, transform_indices = @transform_7, window_bounds = array<i64: 16, 16>}, {pipeline_mode = #tpu.pipeline_mode<synchronous>, transform_indices = @transform_8, window_bounds = array<i64: 1, 16>}, {pipeline_mode = #tpu.pipeline_mode<synchronous>, transform_indices = @transform_9, window_bounds = array<i64: 1, 16>}, {pipeline_mode = #tpu.pipeline_mode<synchronous>, transform_indices = @transform_10, window_bounds = array<i64: 1, 16>}, {pipeline_mode = #tpu.pipeline_mode<synchronous>, transform_indices = @transform_11, window_bounds = array<i64: 1, 16>}, {pipeline_mode = #tpu.pipeline_mode<synchronous>, transform_indices = @transform_12, window_bounds = array<i64: 16, 20>}, {pipeline_mode = #tpu.pipeline_mode<synchronous>, transform_indices = @transform_13, window_bounds = array<i64: 1, 20>}, {pipeline_mode = #tpu.pipeline_mode<synchronous>, transform_indices = @transform_14, window_bounds = array<i64: 20, 128>}, {pipeline_mode = #tpu.pipeline_mode<synchronous>, transform_indices = @transform_15, window_bounds = array<i64: 1, 128>}, {transform_indices = @transform_16, window_bounds = array<i64: 8, 128>}]} {
    %c0 = arith.constant 0 : index
    %c0_0 = arith.constant 0 : index
    %c0_1 = arith.constant 0 : index
    %0 = vector.load %arg2[%c0, %c0_0, %c0_1] : memref<8x8x8xf32, #tpu.memory_space<vmem>>, vector<8x8x8xf32>
    %1 = vector.shape_cast %0 : vector<8x8x8xf32> to vector<64x8xf32>
    %c0_2 = arith.constant 0 : index
    %c0_3 = arith.constant 0 : index
    %2 = vector.load %arg3[%c0_2, %c0_3] : memref<8x16xf32, #tpu.memory_space<vmem>>, vector<8x16xf32>
    %cst = arith.constant dense<0.000000e+00> : vector<64x16xf32>
    %3 = tpu.matmul %1, %2, %cst {dimension_numbers = #tpu.dot_dimension_numbers<[1], [0], [0], [1], [0, 0, 1, 1], [], []>} : vector<64x8xf32>, vector<8x16xf32>, vector<64x16xf32> -> vector<64x16xf32>
    %c0_4 = arith.constant 0 : index
    %c0_5 = arith.constant 0 : index
    %4 = vector.load %arg9[%c0_4, %c0_5] : memref<1x16xf32, #tpu.memory_space<vmem>>, vector<1x16xf32>
    %5 = vector.broadcast %4 : vector<1x16xf32> to vector<64x16xf32>
    %6 = arith.addf %3, %5 : vector<64x16xf32>
    %7 = vector.shape_cast %6 : vector<64x16xf32> to vector<8x8x16xf32>
    %c0_6 = arith.constant 0 : index
    %c0_7 = arith.constant 0 : index
    %c0_8 = arith.constant 0 : index
    %8 = vector.load %arg18[%c0_6, %c0_7, %c0_8] : memref<8x8x16xf32, #tpu.memory_space<vmem>>, vector<8x8x16xf32>
    tpu.vector_store %arg18[%c0_6, %c0_7, %c0_8], %7 {strides = array<i32>} : memref<8x8x16xf32, #tpu.memory_space<vmem>>, vector<8x8x16xf32>,
    %c0_9 = arith.constant 0 : index
    %c0_10 = arith.constant 0 : index
    %9 = vector.load %arg4[%c0_9, %c0_10] : memref<8x16xf32, #tpu.memory_space<vmem>>, vector<8x16xf32>
    %cst_11 = arith.constant dense<0.000000e+00> : vector<64x16xf32>
    %10 = tpu.matmul %1, %9, %cst_11 {dimension_numbers = #tpu.dot_dimension_numbers<[1], [0], [0], [1], [0, 0, 1, 1], [], []>} : vector<64x8xf32>, vector<8x16xf32>, vector<64x16xf32> -> vector<64x16xf32>
    %c0_12 = arith.constant 0 : index
    %c0_13 = arith.constant 0 : index
    %11 = vector.load %arg10[%c0_12, %c0_13] : memref<1x16xf32, #tpu.memory_space<vmem>>, vector<1x16xf32>
    %12 = vector.broadcast %11 : vector<1x16xf32> to vector<64x16xf32>
    %13 = arith.addf %10, %12 : vector<64x16xf32>
    %14 = vector.shape_cast %13 : vector<64x16xf32> to vector<8x8x16xf32>
    %c0_14 = arith.constant 0 : index
    %c0_15 = arith.constant 0 : index
    %c0_16 = arith.constant 0 : index
    %15 = vector.load %arg19[%c0_14, %c0_15, %c0_16] : memref<8x8x16xf32, #tpu.memory_space<vmem>>, vector<8x8x16xf32>
    tpu.vector_store %arg19[%c0_14, %c0_15, %c0_16], %14 {strides = array<i32>} : memref<8x8x16xf32, #tpu.memory_space<vmem>>, vector<8x8x16xf32>,
    %c0_17 = arith.constant 0 : index
    %c0_18 = arith.constant 0 : index
    %16 = vector.load %arg5[%c0_17, %c0_18] : memref<8x16xf32, #tpu.memory_space<vmem>>, vector<8x16xf32>
    %cst_19 = arith.constant dense<0.000000e+00> : vector<64x16xf32>
    %17 = tpu.matmul %1, %16, %cst_19 {dimension_numbers = #tpu.dot_dimension_numbers<[1], [0], [0], [1], [0, 0, 1, 1], [], []>} : vector<64x8xf32>, vector<8x16xf32>, vector<64x16xf32> -> vector<64x16xf32>
    %c0_20 = arith.constant 0 : index
    %c0_21 = arith.constant 0 : index
    %18 = vector.load %arg11[%c0_20, %c0_21] : memref<1x16xf32, #tpu.memory_space<vmem>>, vector<1x16xf32>
    %19 = vector.broadcast %18 : vector<1x16xf32> to vector<64x16xf32>
    %20 = arith.addf %17, %19 : vector<64x16xf32>
    %21 = vector.shape_cast %20 : vector<64x16xf32> to vector<8x8x16xf32>
    %c0_22 = arith.constant 0 : index
    %c0_23 = arith.constant 0 : index
    %c0_24 = arith.constant 0 : index
    %22 = vector.load %arg20[%c0_22, %c0_23, %c0_24] : memref<8x8x16xf32, #tpu.memory_space<vmem>>, vector<8x8x16xf32>
    tpu.vector_store %arg20[%c0_22, %c0_23, %c0_24], %21 {strides = array<i32>} : memref<8x8x16xf32, #tpu.memory_space<vmem>>, vector<8x8x16xf32>,
    %c0_25 = arith.constant 0 : index
    %c0_26 = arith.constant 0 : index
    %23 = vector.load %arg1[%c0_25, %c0_26] : memref<8x1xi32, #tpu.memory_space<vmem>>, vector<8x1xi32>
    %c0_27 = arith.constant 0 : index
    %c0_28 = arith.constant 0 : index
    %24 = vector.load %arg6[%c0_27, %c0_28] : memref<16x16xf32, #tpu.memory_space<vmem>>, vector<16x16xf32>
    %c0_29 = arith.constant 0 : index
    %c0_30 = arith.constant 0 : index
    %25 = vector.load %arg7[%c0_29, %c0_30] : memref<16x16xf32, #tpu.memory_space<vmem>>, vector<16x16xf32>
    %c0_31 = arith.constant 0 : index
    %c0_32 = arith.constant 0 : index
    %26 = vector.load %arg8[%c0_31, %c0_32] : memref<16x16xf32, #tpu.memory_space<vmem>>, vector<16x16xf32>
    %c0_33 = arith.constant 0 : index
    %c0_34 = arith.constant 0 : index
    %27 = vector.load %arg12[%c0_33, %c0_34] : memref<1x16xf32, #tpu.memory_space<vmem>>, vector<1x16xf32>
    %cst_35 = arith.constant 0.000000e+00 : f32
    %28 = vector.broadcast %cst_35 : f32 to vector<8x16xf32>
    %c0_i32 = arith.constant 0 : i32
    %cst_36 = arith.constant dense<0.000000e+00> : vector<8x16xf32>
    %29 = tpu.matmul %28, %24, %cst_36 {dimension_numbers = #tpu.dot_dimension_numbers<[1], [0], [0], [1], [0, 0, 1, 1], [], []>} : vector<8x16xf32>, vector<16x16xf32>, vector<8x16xf32> -> vector<8x16xf32>
    %cst_37 = arith.constant dense<0.000000e+00> : vector<8x16xf32>
    %30 = tpu.matmul %28, %25, %cst_37 {dimension_numbers = #tpu.dot_dimension_numbers<[1], [0], [0], [1], [0, 0, 1, 1], [], []>} : vector<8x16xf32>, vector<16x16xf32>, vector<8x16xf32> -> vector<8x16xf32>
    %cst_38 = arith.constant dense<0.000000e+00> : vector<8x16xf32>
    %31 = tpu.matmul %28, %26, %cst_38 {dimension_numbers = #tpu.dot_dimension_numbers<[1], [0], [0], [1], [0, 0, 1, 1], [], []>} : vector<8x16xf32>, vector<16x16xf32>, vector<8x16xf32> -> vector<8x16xf32>
    %32 = vector.broadcast %27 : vector<1x16xf32> to vector<8x16xf32>
    %33 = arith.addf %31, %32 : vector<8x16xf32>
    %34 = arith.index_cast %c0_i32 : i32 to index
    %c0_39 = arith.constant 0 : index
    %c0_40 = arith.constant 0 : index
    %35 = vector.load %arg18[%34, %c0_39, %c0_40] : memref<8x8x16xf32, #tpu.memory_space<vmem>>, vector<1x8x16xf32>
    %36 = vector.shape_cast %35 : vector<1x8x16xf32> to vector<8x16xf32>
    %37 = arith.addf %36, %29 : vector<8x16xf32>
    %38 = arith.negf %37 : vector<8x16xf32>
    %39 = math.exp %38 : vector<8x16xf32>
    %cst_41 = arith.constant 1.000000e+00 : f32
    %40 = vector.broadcast %cst_41 : f32 to vector<8x16xf32>
    %41 = arith.addf %40, %39 : vector<8x16xf32>
    %42 = arith.divf %40, %41 : vector<8x16xf32>
    %43 = arith.index_cast %c0_i32 : i32 to index
    %c0_42 = arith.constant 0 : index
    %c0_43 = arith.constant 0 : index
    %44 = vector.load %arg19[%43, %c0_42, %c0_43] : memref<8x8x16xf32, #tpu.memory_space<vmem>>, vector<1x8x16xf32>
    %45 = vector.shape_cast %44 : vector<1x8x16xf32> to vector<8x16xf32>
    %46 = arith.addf %45, %30 : vector<8x16xf32>
    %47 = arith.negf %46 : vector<8x16xf32>
    %48 = math.exp %47 : vector<8x16xf32>
    %cst_44 = arith.constant 1.000000e+00 : f32
    %49 = vector.broadcast %cst_44 : f32 to vector<8x16xf32>
    %50 = arith.addf %49, %48 : vector<8x16xf32>
    %51 = arith.divf %49, %50 : vector<8x16xf32>
    %52 = arith.index_cast %c0_i32 : i32 to index
    %c0_45 = arith.constant 0 : index
    %c0_46 = arith.constant 0 : index
    %53 = vector.load %arg20[%52, %c0_45, %c0_46] : memref<8x8x16xf32, #tpu.memory_space<vmem>>, vector<1x8x16xf32>
    %54 = vector.shape_cast %53 : vector<1x8x16xf32> to vector<8x16xf32>
    %55 = arith.mulf %42, %33 : vector<8x16xf32>
    %56 = arith.addf %54, %55 : vector<8x16xf32>
    %57 = math.tanh %56 : vector<8x16xf32>
    %cst_47 = arith.constant 1.000000e+00 : f32
    %58 = vector.broadcast %cst_47 : f32 to vector<8x16xf32>
    %59 = arith.subf %58, %51 : vector<8x16xf32>
    %60 = arith.mulf %59, %57 : vector<8x16xf32>
    %61 = arith.mulf %51, %28 : vector<8x16xf32>
    %62 = arith.addf %60, %61 : vector<8x16xf32>
    %63 = vector.broadcast %c0_i32 : i32 to vector<8x1xi32>
    %64 = arith.cmpi sgt, %23, %63 : vector<8x1xi32>
    %65 = vector.shape_cast %64 : vector<8x1xi1> to vector<8x1xi1>
    %66 = vector.broadcast %65 : vector<8x1xi1> to vector<8x16xi1>
    %67 = arith.select %66, %62, %28 : vector<8x16xi1>, vector<8x16xf32>
    %c1_i32 = arith.constant 1 : i32
    %cst_48 = arith.constant dense<0.000000e+00> : vector<8x16xf32>
    %68 = tpu.matmul %67, %24, %cst_48 {dimension_numbers = #tpu.dot_dimension_numbers<[1], [0], [0], [1], [0, 0, 1, 1], [], []>} : vector<8x16xf32>, vector<16x16xf32>, vector<8x16xf32> -> vector<8x16xf32>
    %cst_49 = arith.constant dense<0.000000e+00> : vector<8x16xf32>
    %69 = tpu.matmul %67, %25, %cst_49 {dimension_numbers = #tpu.dot_dimension_numbers<[1], [0], [0], [1], [0, 0, 1, 1], [], []>} : vector<8x16xf32>, vector<16x16xf32>, vector<8x16xf32> -> vector<8x16xf32>
    %cst_50 = arith.constant dense<0.000000e+00> : vector<8x16xf32>
    %70 = tpu.matmul %67, %26, %cst_50 {dimension_numbers = #tpu.dot_dimension_numbers<[1], [0], [0], [1], [0, 0, 1, 1], [], []>} : vector<8x16xf32>, vector<16x16xf32>, vector<8x16xf32> -> vector<8x16xf32>
    %71 = vector.broadcast %27 : vector<1x16xf32> to vector<8x16xf32>
    %72 = arith.addf %70, %71 : vector<8x16xf32>
    %73 = arith.index_cast %c1_i32 : i32 to index
    %c0_51 = arith.constant 0 : index
    %c0_52 = arith.constant 0 : index
    %74 = vector.load %arg18[%73, %c0_51, %c0_52] : memref<8x8x16xf32, #tpu.memory_space<vmem>>, vector<1x8x16xf32>
    %75 = vector.shape_cast %74 : vector<1x8x16xf32> to vector<8x16xf32>
    %76 = arith.addf %75, %68 : vector<8x16xf32>
    %77 = arith.negf %76 : vector<8x16xf32>
    %78 = math.exp %77 : vector<8x16xf32>
    %cst_53 = arith.constant 1.000000e+00 : f32
    %79 = vector.broadcast %cst_53 : f32 to vector<8x16xf32>
    %80 = arith.addf %79, %78 : vector<8x16xf32>
    %81 = arith.divf %79, %80 : vector<8x16xf32>
    %82 = arith.index_cast %c1_i32 : i32 to index
    %c0_54 = arith.constant 0 : index
    %c0_55 = arith.constant 0 : index
    %83 = vector.load %arg19[%82, %c0_54, %c0_55] : memref<8x8x16xf32, #tpu.memory_space<vmem>>, vector<1x8x16xf32>
    %84 = vector.shape_cast %83 : vector<1x8x16xf32> to vector<8x16xf32>
    %85 = arith.addf %84, %69 : vector<8x16xf32>
    %86 = arith.negf %85 : vector<8x16xf32>
    %87 = math.exp %86 : vector<8x16xf32>
    %cst_56 = arith.constant 1.000000e+00 : f32
    %88 = vector.broadcast %cst_56 : f32 to vector<8x16xf32>
    %89 = arith.addf %88, %87 : vector<8x16xf32>
    %90 = arith.divf %88, %89 : vector<8x16xf32>
    %91 = arith.index_cast %c1_i32 : i32 to index
    %c0_57 = arith.constant 0 : index
    %c0_58 = arith.constant 0 : index
    %92 = vector.load %arg20[%91, %c0_57, %c0_58] : memref<8x8x16xf32, #tpu.memory_space<vmem>>, vector<1x8x16xf32>
    %93 = vector.shape_cast %92 : vector<1x8x16xf32> to vector<8x16xf32>
    %94 = arith.mulf %81, %72 : vector<8x16xf32>
    %95 = arith.addf %93, %94 : vector<8x16xf32>
    %96 = math.tanh %95 : vector<8x16xf32>
    %cst_59 = arith.constant 1.000000e+00 : f32
    %97 = vector.broadcast %cst_59 : f32 to vector<8x16xf32>
    %98 = arith.subf %97, %90 : vector<8x16xf32>
    %99 = arith.mulf %98, %96 : vector<8x16xf32>
    %100 = arith.mulf %90, %67 : vector<8x16xf32>
    %101 = arith.addf %99, %100 : vector<8x16xf32>
    %102 = vector.broadcast %c1_i32 : i32 to vector<8x1xi32>
    %103 = arith.cmpi sgt, %23, %102 : vector<8x1xi32>
    %104 = vector.shape_cast %103 : vector<8x1xi1> to vector<8x1xi1>
    %105 = vector.broadcast %104 : vector<8x1xi1> to vector<8x16xi1>
    %106 = arith.select %105, %101, %67 : vector<8x16xi1>, vector<8x16xf32>
    %c2_i32 = arith.constant 2 : i32
    %cst_60 = arith.constant dense<0.000000e+00> : vector<8x16xf32>
    %107 = tpu.matmul %106, %24, %cst_60 {dimension_numbers = #tpu.dot_dimension_numbers<[1], [0], [0], [1], [0, 0, 1, 1], [], []>} : vector<8x16xf32>, vector<16x16xf32>, vector<8x16xf32> -> vector<8x16xf32>
    %cst_61 = arith.constant dense<0.000000e+00> : vector<8x16xf32>
    %108 = tpu.matmul %106, %25, %cst_61 {dimension_numbers = #tpu.dot_dimension_numbers<[1], [0], [0], [1], [0, 0, 1, 1], [], []>} : vector<8x16xf32>, vector<16x16xf32>, vector<8x16xf32> -> vector<8x16xf32>
    %cst_62 = arith.constant dense<0.000000e+00> : vector<8x16xf32>
    %109 = tpu.matmul %106, %26, %cst_62 {dimension_numbers = #tpu.dot_dimension_numbers<[1], [0], [0], [1], [0, 0, 1, 1], [], []>} : vector<8x16xf32>, vector<16x16xf32>, vector<8x16xf32> -> vector<8x16xf32>
    %110 = vector.broadcast %27 : vector<1x16xf32> to vector<8x16xf32>
    %111 = arith.addf %109, %110 : vector<8x16xf32>
    %112 = arith.index_cast %c2_i32 : i32 to index
    %c0_63 = arith.constant 0 : index
    %c0_64 = arith.constant 0 : index
    %113 = vector.load %arg18[%112, %c0_63, %c0_64] : memref<8x8x16xf32, #tpu.memory_space<vmem>>, vector<1x8x16xf32>
    %114 = vector.shape_cast %113 : vector<1x8x16xf32> to vector<8x16xf32>
    %115 = arith.addf %114, %107 : vector<8x16xf32>
    %116 = arith.negf %115 : vector<8x16xf32>
    %117 = math.exp %116 : vector<8x16xf32>
    %cst_65 = arith.constant 1.000000e+00 : f32
    %118 = vector.broadcast %cst_65 : f32 to vector<8x16xf32>
    %119 = arith.addf %118, %117 : vector<8x16xf32>
    %120 = arith.divf %118, %119 : vector<8x16xf32>
    %121 = arith.index_cast %c2_i32 : i32 to index
    %c0_66 = arith.constant 0 : index
    %c0_67 = arith.constant 0 : index
    %122 = vector.load %arg19[%121, %c0_66, %c0_67] : memref<8x8x16xf32, #tpu.memory_space<vmem>>, vector<1x8x16xf32>
    %123 = vector.shape_cast %122 : vector<1x8x16xf32> to vector<8x16xf32>
    %124 = arith.addf %123, %108 : vector<8x16xf32>
    %125 = arith.negf %124 : vector<8x16xf32>
    %126 = math.exp %125 : vector<8x16xf32>
    %cst_68 = arith.constant 1.000000e+00 : f32
    %127 = vector.broadcast %cst_68 : f32 to vector<8x16xf32>
    %128 = arith.addf %127, %126 : vector<8x16xf32>
    %129 = arith.divf %127, %128 : vector<8x16xf32>
    %130 = arith.index_cast %c2_i32 : i32 to index
    %c0_69 = arith.constant 0 : index
    %c0_70 = arith.constant 0 : index
    %131 = vector.load %arg20[%130, %c0_69, %c0_70] : memref<8x8x16xf32, #tpu.memory_space<vmem>>, vector<1x8x16xf32>
    %132 = vector.shape_cast %131 : vector<1x8x16xf32> to vector<8x16xf32>
    %133 = arith.mulf %120, %111 : vector<8x16xf32>
    %134 = arith.addf %132, %133 : vector<8x16xf32>
    %135 = math.tanh %134 : vector<8x16xf32>
    %cst_71 = arith.constant 1.000000e+00 : f32
    %136 = vector.broadcast %cst_71 : f32 to vector<8x16xf32>
    %137 = arith.subf %136, %129 : vector<8x16xf32>
    %138 = arith.mulf %137, %135 : vector<8x16xf32>
    %139 = arith.mulf %129, %106 : vector<8x16xf32>
    %140 = arith.addf %138, %139 : vector<8x16xf32>
    %141 = vector.broadcast %c2_i32 : i32 to vector<8x1xi32>
    %142 = arith.cmpi sgt, %23, %141 : vector<8x1xi32>
    %143 = vector.shape_cast %142 : vector<8x1xi1> to vector<8x1xi1>
    %144 = vector.broadcast %143 : vector<8x1xi1> to vector<8x16xi1>
    %145 = arith.select %144, %140, %106 : vector<8x16xi1>, vector<8x16xf32>
    %c3_i32 = arith.constant 3 : i32
    %cst_72 = arith.constant dense<0.000000e+00> : vector<8x16xf32>
    %146 = tpu.matmul %145, %24, %cst_72 {dimension_numbers = #tpu.dot_dimension_numbers<[1], [0], [0], [1], [0, 0, 1, 1], [], []>} : vector<8x16xf32>, vector<16x16xf32>, vector<8x16xf32> -> vector<8x16xf32>
    %cst_73 = arith.constant dense<0.000000e+00> : vector<8x16xf32>
    %147 = tpu.matmul %145, %25, %cst_73 {dimension_numbers = #tpu.dot_dimension_numbers<[1], [0], [0], [1], [0, 0, 1, 1], [], []>} : vector<8x16xf32>, vector<16x16xf32>, vector<8x16xf32> -> vector<8x16xf32>
    %cst_74 = arith.constant dense<0.000000e+00> : vector<8x16xf32>
    %148 = tpu.matmul %145, %26, %cst_74 {dimension_numbers = #tpu.dot_dimension_numbers<[1], [0], [0], [1], [0, 0, 1, 1], [], []>} : vector<8x16xf32>, vector<16x16xf32>, vector<8x16xf32> -> vector<8x16xf32>
    %149 = vector.broadcast %27 : vector<1x16xf32> to vector<8x16xf32>
    %150 = arith.addf %148, %149 : vector<8x16xf32>
    %151 = arith.index_cast %c3_i32 : i32 to index
    %c0_75 = arith.constant 0 : index
    %c0_76 = arith.constant 0 : index
    %152 = vector.load %arg18[%151, %c0_75, %c0_76] : memref<8x8x16xf32, #tpu.memory_space<vmem>>, vector<1x8x16xf32>
    %153 = vector.shape_cast %152 : vector<1x8x16xf32> to vector<8x16xf32>
    %154 = arith.addf %153, %146 : vector<8x16xf32>
    %155 = arith.negf %154 : vector<8x16xf32>
    %156 = math.exp %155 : vector<8x16xf32>
    %cst_77 = arith.constant 1.000000e+00 : f32
    %157 = vector.broadcast %cst_77 : f32 to vector<8x16xf32>
    %158 = arith.addf %157, %156 : vector<8x16xf32>
    %159 = arith.divf %157, %158 : vector<8x16xf32>
    %160 = arith.index_cast %c3_i32 : i32 to index
    %c0_78 = arith.constant 0 : index
    %c0_79 = arith.constant 0 : index
    %161 = vector.load %arg19[%160, %c0_78, %c0_79] : memref<8x8x16xf32, #tpu.memory_space<vmem>>, vector<1x8x16xf32>
    %162 = vector.shape_cast %161 : vector<1x8x16xf32> to vector<8x16xf32>
    %163 = arith.addf %162, %147 : vector<8x16xf32>
    %164 = arith.negf %163 : vector<8x16xf32>
    %165 = math.exp %164 : vector<8x16xf32>
    %cst_80 = arith.constant 1.000000e+00 : f32
    %166 = vector.broadcast %cst_80 : f32 to vector<8x16xf32>
    %167 = arith.addf %166, %165 : vector<8x16xf32>
    %168 = arith.divf %166, %167 : vector<8x16xf32>
    %169 = arith.index_cast %c3_i32 : i32 to index
    %c0_81 = arith.constant 0 : index
    %c0_82 = arith.constant 0 : index
    %170 = vector.load %arg20[%169, %c0_81, %c0_82] : memref<8x8x16xf32, #tpu.memory_space<vmem>>, vector<1x8x16xf32>
    %171 = vector.shape_cast %170 : vector<1x8x16xf32> to vector<8x16xf32>
    %172 = arith.mulf %159, %150 : vector<8x16xf32>
    %173 = arith.addf %171, %172 : vector<8x16xf32>
    %174 = math.tanh %173 : vector<8x16xf32>
    %cst_83 = arith.constant 1.000000e+00 : f32
    %175 = vector.broadcast %cst_83 : f32 to vector<8x16xf32>
    %176 = arith.subf %175, %168 : vector<8x16xf32>
    %177 = arith.mulf %176, %174 : vector<8x16xf32>
    %178 = arith.mulf %168, %145 : vector<8x16xf32>
    %179 = arith.addf %177, %178 : vector<8x16xf32>
    %180 = vector.broadcast %c3_i32 : i32 to vector<8x1xi32>
    %181 = arith.cmpi sgt, %23, %180 : vector<8x1xi32>
    %182 = vector.shape_cast %181 : vector<8x1xi1> to vector<8x1xi1>
    %183 = vector.broadcast %182 : vector<8x1xi1> to vector<8x16xi1>
    %184 = arith.select %183, %179, %145 : vector<8x16xi1>, vector<8x16xf32>
    %c4_i32 = arith.constant 4 : i32
    %cst_84 = arith.constant dense<0.000000e+00> : vector<8x16xf32>
    %185 = tpu.matmul %184, %24, %cst_84 {dimension_numbers = #tpu.dot_dimension_numbers<[1], [0], [0], [1], [0, 0, 1, 1], [], []>} : vector<8x16xf32>, vector<16x16xf32>, vector<8x16xf32> -> vector<8x16xf32>
    %cst_85 = arith.constant dense<0.000000e+00> : vector<8x16xf32>
    %186 = tpu.matmul %184, %25, %cst_85 {dimension_numbers = #tpu.dot_dimension_numbers<[1], [0], [0], [1], [0, 0, 1, 1], [], []>} : vector<8x16xf32>, vector<16x16xf32>, vector<8x16xf32> -> vector<8x16xf32>
    %cst_86 = arith.constant dense<0.000000e+00> : vector<8x16xf32>
    %187 = tpu.matmul %184, %26, %cst_86 {dimension_numbers = #tpu.dot_dimension_numbers<[1], [0], [0], [1], [0, 0, 1, 1], [], []>} : vector<8x16xf32>, vector<16x16xf32>, vector<8x16xf32> -> vector<8x16xf32>
    %188 = vector.broadcast %27 : vector<1x16xf32> to vector<8x16xf32>
    %189 = arith.addf %187, %188 : vector<8x16xf32>
    %190 = arith.index_cast %c4_i32 : i32 to index
    %c0_87 = arith.constant 0 : index
    %c0_88 = arith.constant 0 : index
    %191 = vector.load %arg18[%190, %c0_87, %c0_88] : memref<8x8x16xf32, #tpu.memory_space<vmem>>, vector<1x8x16xf32>
    %192 = vector.shape_cast %191 : vector<1x8x16xf32> to vector<8x16xf32>
    %193 = arith.addf %192, %185 : vector<8x16xf32>
    %194 = arith.negf %193 : vector<8x16xf32>
    %195 = math.exp %194 : vector<8x16xf32>
    %cst_89 = arith.constant 1.000000e+00 : f32
    %196 = vector.broadcast %cst_89 : f32 to vector<8x16xf32>
    %197 = arith.addf %196, %195 : vector<8x16xf32>
    %198 = arith.divf %196, %197 : vector<8x16xf32>
    %199 = arith.index_cast %c4_i32 : i32 to index
    %c0_90 = arith.constant 0 : index
    %c0_91 = arith.constant 0 : index
    %200 = vector.load %arg19[%199, %c0_90, %c0_91] : memref<8x8x16xf32, #tpu.memory_space<vmem>>, vector<1x8x16xf32>
    %201 = vector.shape_cast %200 : vector<1x8x16xf32> to vector<8x16xf32>
    %202 = arith.addf %201, %186 : vector<8x16xf32>
    %203 = arith.negf %202 : vector<8x16xf32>
    %204 = math.exp %203 : vector<8x16xf32>
    %cst_92 = arith.constant 1.000000e+00 : f32
    %205 = vector.broadcast %cst_92 : f32 to vector<8x16xf32>
    %206 = arith.addf %205, %204 : vector<8x16xf32>
    %207 = arith.divf %205, %206 : vector<8x16xf32>
    %208 = arith.index_cast %c4_i32 : i32 to index
    %c0_93 = arith.constant 0 : index
    %c0_94 = arith.constant 0 : index
    %209 = vector.load %arg20[%208, %c0_93, %c0_94] : memref<8x8x16xf32, #tpu.memory_space<vmem>>, vector<1x8x16xf32>
    %210 = vector.shape_cast %209 : vector<1x8x16xf32> to vector<8x16xf32>
    %211 = arith.mulf %198, %189 : vector<8x16xf32>
    %212 = arith.addf %210, %211 : vector<8x16xf32>
    %213 = math.tanh %212 : vector<8x16xf32>
    %cst_95 = arith.constant 1.000000e+00 : f32
    %214 = vector.broadcast %cst_95 : f32 to vector<8x16xf32>
    %215 = arith.subf %214, %207 : vector<8x16xf32>
    %216 = arith.mulf %215, %213 : vector<8x16xf32>
    %217 = arith.mulf %207, %184 : vector<8x16xf32>
    %218 = arith.addf %216, %217 : vector<8x16xf32>
    %219 = vector.broadcast %c4_i32 : i32 to vector<8x1xi32>
    %220 = arith.cmpi sgt, %23, %219 : vector<8x1xi32>
    %221 = vector.shape_cast %220 : vector<8x1xi1> to vector<8x1xi1>
    %222 = vector.broadcast %221 : vector<8x1xi1> to vector<8x16xi1>
    %223 = arith.select %222, %218, %184 : vector<8x16xi1>, vector<8x16xf32>
    %c5_i32 = arith.constant 5 : i32
    %cst_96 = arith.constant dense<0.000000e+00> : vector<8x16xf32>
    %224 = tpu.matmul %223, %24, %cst_96 {dimension_numbers = #tpu.dot_dimension_numbers<[1], [0], [0], [1], [0, 0, 1, 1], [], []>} : vector<8x16xf32>, vector<16x16xf32>, vector<8x16xf32> -> vector<8x16xf32>
    %cst_97 = arith.constant dense<0.000000e+00> : vector<8x16xf32>
    %225 = tpu.matmul %223, %25, %cst_97 {dimension_numbers = #tpu.dot_dimension_numbers<[1], [0], [0], [1], [0, 0, 1, 1], [], []>} : vector<8x16xf32>, vector<16x16xf32>, vector<8x16xf32> -> vector<8x16xf32>
    %cst_98 = arith.constant dense<0.000000e+00> : vector<8x16xf32>
    %226 = tpu.matmul %223, %26, %cst_98 {dimension_numbers = #tpu.dot_dimension_numbers<[1], [0], [0], [1], [0, 0, 1, 1], [], []>} : vector<8x16xf32>, vector<16x16xf32>, vector<8x16xf32> -> vector<8x16xf32>
    %227 = vector.broadcast %27 : vector<1x16xf32> to vector<8x16xf32>
    %228 = arith.addf %226, %227 : vector<8x16xf32>
    %229 = arith.index_cast %c5_i32 : i32 to index
    %c0_99 = arith.constant 0 : index
    %c0_100 = arith.constant 0 : index
    %230 = vector.load %arg18[%229, %c0_99, %c0_100] : memref<8x8x16xf32, #tpu.memory_space<vmem>>, vector<1x8x16xf32>
    %231 = vector.shape_cast %230 : vector<1x8x16xf32> to vector<8x16xf32>
    %232 = arith.addf %231, %224 : vector<8x16xf32>
    %233 = arith.negf %232 : vector<8x16xf32>
    %234 = math.exp %233 : vector<8x16xf32>
    %cst_101 = arith.constant 1.000000e+00 : f32
    %235 = vector.broadcast %cst_101 : f32 to vector<8x16xf32>
    %236 = arith.addf %235, %234 : vector<8x16xf32>
    %237 = arith.divf %235, %236 : vector<8x16xf32>
    %238 = arith.index_cast %c5_i32 : i32 to index
    %c0_102 = arith.constant 0 : index
    %c0_103 = arith.constant 0 : index
    %239 = vector.load %arg19[%238, %c0_102, %c0_103] : memref<8x8x16xf32, #tpu.memory_space<vmem>>, vector<1x8x16xf32>
    %240 = vector.shape_cast %239 : vector<1x8x16xf32> to vector<8x16xf32>
    %241 = arith.addf %240, %225 : vector<8x16xf32>
    %242 = arith.negf %241 : vector<8x16xf32>
    %243 = math.exp %242 : vector<8x16xf32>
    %cst_104 = arith.constant 1.000000e+00 : f32
    %244 = vector.broadcast %cst_104 : f32 to vector<8x16xf32>
    %245 = arith.addf %244, %243 : vector<8x16xf32>
    %246 = arith.divf %244, %245 : vector<8x16xf32>
    %247 = arith.index_cast %c5_i32 : i32 to index
    %c0_105 = arith.constant 0 : index
    %c0_106 = arith.constant 0 : index
    %248 = vector.load %arg20[%247, %c0_105, %c0_106] : memref<8x8x16xf32, #tpu.memory_space<vmem>>, vector<1x8x16xf32>
    %249 = vector.shape_cast %248 : vector<1x8x16xf32> to vector<8x16xf32>
    %250 = arith.mulf %237, %228 : vector<8x16xf32>
    %251 = arith.addf %249, %250 : vector<8x16xf32>
    %252 = math.tanh %251 : vector<8x16xf32>
    %cst_107 = arith.constant 1.000000e+00 : f32
    %253 = vector.broadcast %cst_107 : f32 to vector<8x16xf32>
    %254 = arith.subf %253, %246 : vector<8x16xf32>
    %255 = arith.mulf %254, %252 : vector<8x16xf32>
    %256 = arith.mulf %246, %223 : vector<8x16xf32>
    %257 = arith.addf %255, %256 : vector<8x16xf32>
    %258 = vector.broadcast %c5_i32 : i32 to vector<8x1xi32>
    %259 = arith.cmpi sgt, %23, %258 : vector<8x1xi32>
    %260 = vector.shape_cast %259 : vector<8x1xi1> to vector<8x1xi1>
    %261 = vector.broadcast %260 : vector<8x1xi1> to vector<8x16xi1>
    %262 = arith.select %261, %257, %223 : vector<8x16xi1>, vector<8x16xf32>
    %c6_i32 = arith.constant 6 : i32
    %cst_108 = arith.constant dense<0.000000e+00> : vector<8x16xf32>
    %263 = tpu.matmul %262, %24, %cst_108 {dimension_numbers = #tpu.dot_dimension_numbers<[1], [0], [0], [1], [0, 0, 1, 1], [], []>} : vector<8x16xf32>, vector<16x16xf32>, vector<8x16xf32> -> vector<8x16xf32>
    %cst_109 = arith.constant dense<0.000000e+00> : vector<8x16xf32>
    %264 = tpu.matmul %262, %25, %cst_109 {dimension_numbers = #tpu.dot_dimension_numbers<[1], [0], [0], [1], [0, 0, 1, 1], [], []>} : vector<8x16xf32>, vector<16x16xf32>, vector<8x16xf32> -> vector<8x16xf32>
    %cst_110 = arith.constant dense<0.000000e+00> : vector<8x16xf32>
    %265 = tpu.matmul %262, %26, %cst_110 {dimension_numbers = #tpu.dot_dimension_numbers<[1], [0], [0], [1], [0, 0, 1, 1], [], []>} : vector<8x16xf32>, vector<16x16xf32>, vector<8x16xf32> -> vector<8x16xf32>
    %266 = vector.broadcast %27 : vector<1x16xf32> to vector<8x16xf32>
    %267 = arith.addf %265, %266 : vector<8x16xf32>
    %268 = arith.index_cast %c6_i32 : i32 to index
    %c0_111 = arith.constant 0 : index
    %c0_112 = arith.constant 0 : index
    %269 = vector.load %arg18[%268, %c0_111, %c0_112] : memref<8x8x16xf32, #tpu.memory_space<vmem>>, vector<1x8x16xf32>
    %270 = vector.shape_cast %269 : vector<1x8x16xf32> to vector<8x16xf32>
    %271 = arith.addf %270, %263 : vector<8x16xf32>
    %272 = arith.negf %271 : vector<8x16xf32>
    %273 = math.exp %272 : vector<8x16xf32>
    %cst_113 = arith.constant 1.000000e+00 : f32
    %274 = vector.broadcast %cst_113 : f32 to vector<8x16xf32>
    %275 = arith.addf %274, %273 : vector<8x16xf32>
    %276 = arith.divf %274, %275 : vector<8x16xf32>
    %277 = arith.index_cast %c6_i32 : i32 to index
    %c0_114 = arith.constant 0 : index
    %c0_115 = arith.constant 0 : index
    %278 = vector.load %arg19[%277, %c0_114, %c0_115] : memref<8x8x16xf32, #tpu.memory_space<vmem>>, vector<1x8x16xf32>
    %279 = vector.shape_cast %278 : vector<1x8x16xf32> to vector<8x16xf32>
    %280 = arith.addf %279, %264 : vector<8x16xf32>
    %281 = arith.negf %280 : vector<8x16xf32>
    %282 = math.exp %281 : vector<8x16xf32>
    %cst_116 = arith.constant 1.000000e+00 : f32
    %283 = vector.broadcast %cst_116 : f32 to vector<8x16xf32>
    %284 = arith.addf %283, %282 : vector<8x16xf32>
    %285 = arith.divf %283, %284 : vector<8x16xf32>
    %286 = arith.index_cast %c6_i32 : i32 to index
    %c0_117 = arith.constant 0 : index
    %c0_118 = arith.constant 0 : index
    %287 = vector.load %arg20[%286, %c0_117, %c0_118] : memref<8x8x16xf32, #tpu.memory_space<vmem>>, vector<1x8x16xf32>
    %288 = vector.shape_cast %287 : vector<1x8x16xf32> to vector<8x16xf32>
    %289 = arith.mulf %276, %267 : vector<8x16xf32>
    %290 = arith.addf %288, %289 : vector<8x16xf32>
    %291 = math.tanh %290 : vector<8x16xf32>
    %cst_119 = arith.constant 1.000000e+00 : f32
    %292 = vector.broadcast %cst_119 : f32 to vector<8x16xf32>
    %293 = arith.subf %292, %285 : vector<8x16xf32>
    %294 = arith.mulf %293, %291 : vector<8x16xf32>
    %295 = arith.mulf %285, %262 : vector<8x16xf32>
    %296 = arith.addf %294, %295 : vector<8x16xf32>
    %297 = vector.broadcast %c6_i32 : i32 to vector<8x1xi32>
    %298 = arith.cmpi sgt, %23, %297 : vector<8x1xi32>
    %299 = vector.shape_cast %298 : vector<8x1xi1> to vector<8x1xi1>
    %300 = vector.broadcast %299 : vector<8x1xi1> to vector<8x16xi1>
    %301 = arith.select %300, %296, %262 : vector<8x16xi1>, vector<8x16xf32>
    %c7_i32 = arith.constant 7 : i32
    %cst_120 = arith.constant dense<0.000000e+00> : vector<8x16xf32>
    %302 = tpu.matmul %301, %24, %cst_120 {dimension_numbers = #tpu.dot_dimension_numbers<[1], [0], [0], [1], [0, 0, 1, 1], [], []>} : vector<8x16xf32>, vector<16x16xf32>, vector<8x16xf32> -> vector<8x16xf32>
    %cst_121 = arith.constant dense<0.000000e+00> : vector<8x16xf32>
    %303 = tpu.matmul %301, %25, %cst_121 {dimension_numbers = #tpu.dot_dimension_numbers<[1], [0], [0], [1], [0, 0, 1, 1], [], []>} : vector<8x16xf32>, vector<16x16xf32>, vector<8x16xf32> -> vector<8x16xf32>
    %cst_122 = arith.constant dense<0.000000e+00> : vector<8x16xf32>
    %304 = tpu.matmul %301, %26, %cst_122 {dimension_numbers = #tpu.dot_dimension_numbers<[1], [0], [0], [1], [0, 0, 1, 1], [], []>} : vector<8x16xf32>, vector<16x16xf32>, vector<8x16xf32> -> vector<8x16xf32>
    %305 = vector.broadcast %27 : vector<1x16xf32> to vector<8x16xf32>
    %306 = arith.addf %304, %305 : vector<8x16xf32>
    %307 = arith.index_cast %c7_i32 : i32 to index
    %c0_123 = arith.constant 0 : index
    %c0_124 = arith.constant 0 : index
    %308 = vector.load %arg18[%307, %c0_123, %c0_124] : memref<8x8x16xf32, #tpu.memory_space<vmem>>, vector<1x8x16xf32>
    %309 = vector.shape_cast %308 : vector<1x8x16xf32> to vector<8x16xf32>
    %310 = arith.addf %309, %302 : vector<8x16xf32>
    %311 = arith.negf %310 : vector<8x16xf32>
    %312 = math.exp %311 : vector<8x16xf32>
    %cst_125 = arith.constant 1.000000e+00 : f32
    %313 = vector.broadcast %cst_125 : f32 to vector<8x16xf32>
    %314 = arith.addf %313, %312 : vector<8x16xf32>
    %315 = arith.divf %313, %314 : vector<8x16xf32>
    %316 = arith.index_cast %c7_i32 : i32 to index
    %c0_126 = arith.constant 0 : index
    %c0_127 = arith.constant 0 : index
    %317 = vector.load %arg19[%316, %c0_126, %c0_127] : memref<8x8x16xf32, #tpu.memory_space<vmem>>, vector<1x8x16xf32>
    %318 = vector.shape_cast %317 : vector<1x8x16xf32> to vector<8x16xf32>
    %319 = arith.addf %318, %303 : vector<8x16xf32>
    %320 = arith.negf %319 : vector<8x16xf32>
    %321 = math.exp %320 : vector<8x16xf32>
    %cst_128 = arith.constant 1.000000e+00 : f32
    %322 = vector.broadcast %cst_128 : f32 to vector<8x16xf32>
    %323 = arith.addf %322, %321 : vector<8x16xf32>
    %324 = arith.divf %322, %323 : vector<8x16xf32>
    %325 = arith.index_cast %c7_i32 : i32 to index
    %c0_129 = arith.constant 0 : index
    %c0_130 = arith.constant 0 : index
    %326 = vector.load %arg20[%325, %c0_129, %c0_130] : memref<8x8x16xf32, #tpu.memory_space<vmem>>, vector<1x8x16xf32>
    %327 = vector.shape_cast %326 : vector<1x8x16xf32> to vector<8x16xf32>
    %328 = arith.mulf %315, %306 : vector<8x16xf32>
    %329 = arith.addf %327, %328 : vector<8x16xf32>
    %330 = math.tanh %329 : vector<8x16xf32>
    %cst_131 = arith.constant 1.000000e+00 : f32
    %331 = vector.broadcast %cst_131 : f32 to vector<8x16xf32>
    %332 = arith.subf %331, %324 : vector<8x16xf32>
    %333 = arith.mulf %332, %330 : vector<8x16xf32>
    %334 = arith.mulf %324, %301 : vector<8x16xf32>
    %335 = arith.addf %333, %334 : vector<8x16xf32>
    %336 = vector.broadcast %c7_i32 : i32 to vector<8x1xi32>
    %337 = arith.cmpi sgt, %23, %336 : vector<8x1xi32>
    %338 = vector.shape_cast %337 : vector<8x1xi1> to vector<8x1xi1>
    %339 = vector.broadcast %338 : vector<8x1xi1> to vector<8x16xi1>
    %340 = arith.select %339, %335, %301 : vector<8x16xi1>, vector<8x16xf32>
    %c8_i32 = arith.constant 8 : i32
    %c0_132 = arith.constant 0 : index
    %c0_133 = arith.constant 0 : index
    %341 = vector.load %arg13[%c0_132, %c0_133] : memref<16x20xf32, #tpu.memory_space<vmem>>, vector<16x20xf32>
    %cst_134 = arith.constant dense<0.000000e+00> : vector<8x20xf32>
    %342 = tpu.matmul %340, %341, %cst_134 {dimension_numbers = #tpu.dot_dimension_numbers<[1], [0], [0], [1], [0, 0, 1, 1], [], []>} : vector<8x16xf32>, vector<16x20xf32>, vector<8x20xf32> -> vector<8x20xf32>
    %c0_135 = arith.constant 0 : index
    %c0_136 = arith.constant 0 : index
    %343 = vector.load %arg14[%c0_135, %c0_136] : memref<1x20xf32, #tpu.memory_space<vmem>>, vector<1x20xf32>
    %344 = vector.broadcast %343 : vector<1x20xf32> to vector<8x20xf32>
    %345 = arith.addf %342, %344 : vector<8x20xf32>
    %346 = math.tanh %345 : vector<8x20xf32>
    %c0_137 = arith.constant 0 : index
    %c0_138 = arith.constant 0 : index
    %347 = vector.load %arg15[%c0_137, %c0_138] : memref<20x128xf32, #tpu.memory_space<vmem>>, vector<20x128xf32>
    %cst_139 = arith.constant dense<0.000000e+00> : vector<8x128xf32>
    %348 = tpu.matmul %346, %347, %cst_139 {dimension_numbers = #tpu.dot_dimension_numbers<[1], [0], [0], [1], [0, 0, 1, 1], [], []>} : vector<8x20xf32>, vector<20x128xf32>, vector<8x128xf32> -> vector<8x128xf32>
    %c0_140 = arith.constant 0 : index
    %c0_141 = arith.constant 0 : index
    %349 = vector.load %arg16[%c0_140, %c0_141] : memref<1x128xf32, #tpu.memory_space<vmem>>, vector<1x128xf32>
    %350 = vector.broadcast %349 : vector<1x128xf32> to vector<8x128xf32>
    %351 = arith.addf %348, %350 : vector<8x128xf32>
    %c0_142 = arith.constant 0 : index
    %c0_143 = arith.constant 0 : index
    %352 = vector.load %arg17[%c0_142, %c0_143] : memref<8x128xf32, #tpu.memory_space<vmem>>, vector<8x128xf32>
    tpu.vector_store %arg17[%c0_142, %c0_143], %351 {strides = array<i32>} : memref<8x128xf32, #tpu.memory_space<vmem>>, vector<8x128xf32>,
    return
  }
  func.func @transform_0(%arg0: i32) -> (i32, i32) {
    %c0_i32 = arith.constant 0 : i32
    %c0_i32_0 = arith.constant 0 : i32
    return %arg0, %c0_i32 : i32, i32
  }
  func.func @transform_1(%arg0: i32) -> (i32, i32, i32) {
    %c0_i32 = arith.constant 0 : i32
    %c0_i32_0 = arith.constant 0 : i32
    %c0_i32_1 = arith.constant 0 : i32
    return %c0_i32, %arg0, %c0_i32_0 : i32, i32, i32
  }
  func.func @transform_2(%arg0: i32) -> (i32, i32) {
    %c0_i32 = arith.constant 0 : i32
    %c0_i32_0 = arith.constant 0 : i32
    %c0_i32_1 = arith.constant 0 : i32
    return %c0_i32, %c0_i32_0 : i32, i32
  }
  func.func @transform_3(%arg0: i32) -> (i32, i32) {
    %c0_i32 = arith.constant 0 : i32
    %c0_i32_0 = arith.constant 0 : i32
    %c0_i32_1 = arith.constant 0 : i32
    return %c0_i32, %c0_i32_0 : i32, i32
  }
  func.func @transform_4(%arg0: i32) -> (i32, i32) {
    %c0_i32 = arith.constant 0 : i32
    %c0_i32_0 = arith.constant 0 : i32
    %c0_i32_1 = arith.constant 0 : i32
    return %c0_i32, %c0_i32_0 : i32, i32
  }
  func.func @transform_5(%arg0: i32) -> (i32, i32) {
    %c0_i32 = arith.constant 0 : i32
    %c0_i32_0 = arith.constant 0 : i32
    %c0_i32_1 = arith.constant 0 : i32
    return %c0_i32, %c0_i32_0 : i32, i32
  }
  func.func @transform_6(%arg0: i32) -> (i32, i32) {
    %c0_i32 = arith.constant 0 : i32
    %c0_i32_0 = arith.constant 0 : i32
    %c0_i32_1 = arith.constant 0 : i32
    return %c0_i32, %c0_i32_0 : i32, i32
  }
  func.func @transform_7(%arg0: i32) -> (i32, i32) {
    %c0_i32 = arith.constant 0 : i32
    %c0_i32_0 = arith.constant 0 : i32
    %c0_i32_1 = arith.constant 0 : i32
    return %c0_i32, %c0_i32_0 : i32, i32
  }
  func.func @transform_8(%arg0: i32) -> (i32, i32) {
    %c0_i32 = arith.constant 0 : i32
    %c0_i32_0 = arith.constant 0 : i32
    %c0_i32_1 = arith.constant 0 : i32
    return %c0_i32, %c0_i32_0 : i32, i32
  }
  func.func @transform_9(%arg0: i32) -> (i32, i32) {
    %c0_i32 = arith.constant 0 : i32
    %c0_i32_0 = arith.constant 0 : i32
    %c0_i32_1 = arith.constant 0 : i32
    return %c0_i32, %c0_i32_0 : i32, i32
  }
  func.func @transform_10(%arg0: i32) -> (i32, i32) {
    %c0_i32 = arith.constant 0 : i32
    %c0_i32_0 = arith.constant 0 : i32
    %c0_i32_1 = arith.constant 0 : i32
    return %c0_i32, %c0_i32_0 : i32, i32
  }
  func.func @transform_11(%arg0: i32) -> (i32, i32) {
    %c0_i32 = arith.constant 0 : i32
    %c0_i32_0 = arith.constant 0 : i32
    %c0_i32_1 = arith.constant 0 : i32
    return %c0_i32, %c0_i32_0 : i32, i32
  }
  func.func @transform_12(%arg0: i32) -> (i32, i32) {
    %c0_i32 = arith.constant 0 : i32
    %c0_i32_0 = arith.constant 0 : i32
    %c0_i32_1 = arith.constant 0 : i32
    return %c0_i32, %c0_i32_0 : i32, i32
  }
  func.func @transform_13(%arg0: i32) -> (i32, i32) {
    %c0_i32 = arith.constant 0 : i32
    %c0_i32_0 = arith.constant 0 : i32
    %c0_i32_1 = arith.constant 0 : i32
    return %c0_i32, %c0_i32_0 : i32, i32
  }
  func.func @transform_14(%arg0: i32) -> (i32, i32) {
    %c0_i32 = arith.constant 0 : i32
    %c0_i32_0 = arith.constant 0 : i32
    %c0_i32_1 = arith.constant 0 : i32
    return %c0_i32, %c0_i32_0 : i32, i32
  }
  func.func @transform_15(%arg0: i32) -> (i32, i32) {
    %c0_i32 = arith.constant 0 : i32
    %c0_i32_0 = arith.constant 0 : i32
    %c0_i32_1 = arith.constant 0 : i32
    return %c0_i32, %c0_i32_0 : i32, i32
  }
  func.func @transform_16(%arg0: i32) -> (i32, i32) {
    %c0_i32 = arith.constant 0 : i32
    %c0_i32_0 = arith.constant 0 : i32
    return %arg0, %c0_i32 : i32, i32
  }
}

</mosaic_0001>

<llo_original>
// kernel: tpu_custom_call.1
$region0: #{tpu_custom_call.1}
  #allocation0 [shape = 'u32[]', space=smem, size = 0x4, offset = 0x4, fixed_abs, tag = 'smem constant byte address 0x4 - core index']
  #allocation1 [shape = 'u32[72,128]{1,0:T(1,128)}', space=vmem, size = 0x9000, scoped, tag = 'internal scratch']
  #allocation2 [shape = 'f32[8,8,16]{2,1,0:T(8,128)}', space=vmem, size = 0x8000, scoped, tag = 'scratch operand']
  #allocation3 [shape = 'f32[8,8,16]{2,1,0:T(8,128)}', space=vmem, size = 0x8000, scoped, tag = 'scratch operand']
  #allocation4 [shape = 'f32[8,8,16]{2,1,0:T(8,128)}', space=vmem, size = 0x8000, scoped, tag = 'scratch operand']
  %s0 = inlined_call_operand.vmem [shape: s32[8,1], index: 0, kind: input, shape index: {}]
  %s1 = inlined_call_operand.hbm [shape: f32[8,8,8], index: 1, kind: input, shape index: {}]
  %s2 = inlined_call_operand.hbm [shape: f32[8,16], index: 2, kind: input, shape index: {}]
  %s3 = inlined_call_operand.hbm [shape: f32[8,16], index: 3, kind: input, shape index: {}]
  %s4 = inlined_call_operand.hbm [shape: f32[8,16], index: 4, kind: input, shape index: {}]
  %s5 = inlined_call_operand.hbm [shape: f32[16,16], index: 5, kind: input, shape index: {}]
  %s6 = inlined_call_operand.hbm [shape: f32[16,16], index: 6, kind: input, shape index: {}]
  %s7 = inlined_call_operand.hbm [shape: f32[16,16], index: 7, kind: input, shape index: {}]
  %s8 = inlined_call_operand.vmem [shape: f32[1,16], index: 8, kind: input, shape index: {}]
  %s9 = inlined_call_operand.vmem [shape: f32[1,16], index: 9, kind: input, shape index: {}]
  %s10 = inlined_call_operand.vmem [shape: f32[1,16], index: 10, kind: input, shape index: {}]
  %s11 = inlined_call_operand.vmem [shape: f32[1,16], index: 11, kind: input, shape index: {}]
  %s12 = inlined_call_operand.vmem [shape: f32[16,20], index: 12, kind: input, shape index: {}]
  %s13 = inlined_call_operand.vmem [shape: f32[1,20], index: 13, kind: input, shape index: {}]
  %s14 = inlined_call_operand.hbm [shape: f32[20,128], index: 14, kind: input, shape index: {}]
  %s15 = inlined_call_operand.vmem [shape: f32[1,128], index: 15, kind: input, shape index: {}]
  %s16 = inlined_call_operand.hbm [shape: f32[8,128], index: 16, kind: output, shape index: {}]
  %s17 = sld [smem:[#allocation0]]
  $region106: #{tpu_custom_call.1} parent=0
    _
  %s19 = ssub.s32 1, %s17
  %s20 = scalar_select 0, %s19, %s17
  $region1: #{tpu_custom_call.1} parent=0
    #allocation5 [shape = 'u8[32768]{0}', space=vmem, size = 0x8000, scoped, tag = 'input window, operand 1, single buffered']
    #allocation6 [shape = 's32[1]{0}', space=sflag, size = 0x4, scoped, tag = 'scoped memory for tpu_custom_call.1']
    #allocation7 [shape = 's32[1]{0}', space=sflag, size = 0x4, scoped, tag = 'scoped memory for tpu_custom_call.1']
    #allocation8 [shape = 'u8[4096]{0}', space=vmem, size = 0x1000, scoped, tag = 'input window, operand 2, single buffered']
    #allocation9 [shape = 's32[1]{0}', space=sflag, size = 0x4, scoped, tag = 'scoped memory for tpu_custom_call.1']
    #allocation10 [shape = 'u8[4096]{0}', space=vmem, size = 0x1000, scoped, tag = 'input window, operand 3, single buffered']
    #allocation11 [shape = 'u8[4096]{0}', space=vmem, size = 0x1000, scoped, tag = 'input window, operand 4, single buffered']
    #allocation12 [shape = 's32[1]{0}', space=sflag, size = 0x4, scoped, tag = 'scoped memory for tpu_custom_call.1']
    #allocation13 [shape = 'u8[8192]{0}', space=vmem, size = 0x2000, scoped, tag = 'input window, operand 5, single buffered']
    #allocation14 [shape = 'u8[8192]{0}', space=vmem, size = 0x2000, scoped, tag = 'input window, operand 6, single buffered']
    #allocation15 [shape = 's32[1]{0}', space=sflag, size = 0x4, scoped, tag = 'scoped memory for tpu_custom_call.1']
    #allocation16 [shape = 'u8[8192]{0}', space=vmem, size = 0x2000, scoped, tag = 'input window, operand 7, single buffered']
    #allocation17 [shape = 'u8[12288]{0}', space=vmem, size = 0x3000, scoped, tag = 'input window, operand 14, single buffered']
    #allocation18 [shape = 's32[1]{0}', space=sflag, size = 0x4, scoped, tag = 'scoped memory for tpu_custom_call.1']
    #allocation19 [shape = 'u8[4096]{0}', space=vmem, size = 0x1000, scoped, tag = 'output window, operand 0, single buffered']
    %21 = vsyncpa [#allocation6], 0
    %22 = vsyncpa [#allocation9], 0
    %23 = vsyncpa [#allocation12], 0
    %24 = vsyncpa [#allocation15], 0
    %25 = vsyncpa [#allocation18], 0
    %26 = vsyncpa [#allocation7], 0
    // Predicated region
    $region2: #{tpu_custom_call.1} parent=1 // pred_check
      _
    $region3: #{tpu_custom_call.1} parent=1 // pred_check_branch
      %28 = sbr.rel (0) target = $region5
    $region4: #{tpu_custom_call.1} parent=1 // pred_region
      _
    $region5: #{tpu_custom_call.1} parent=1 // pred_fallthru
      _
    // Predicated region
    $region6: #{tpu_custom_call.1} parent=1 // pred_check
      _
    $region7: #{tpu_custom_call.1} parent=1 // pred_check_branch
      %30 = sbr.rel (0) target = $region9
    $region8: #{tpu_custom_call.1} parent=1 // pred_region
      %32 = vsyncadd [#allocation6], 0
      %s33 = sshll.u32 %s1, 4
      %s34 = int_to_ptr.hbm [resolvable:$true] %s33
      %s35 = sshll.u32 [#allocation5], 4
      %s36 = int_to_ptr.vmem [resolvable:$true] %s35
      %41 = dma.hbm_to_vmem [thread:$0]  %s34, 1024, %s36, [#allocation6], 128, 128, 8
    $region9: #{tpu_custom_call.1} parent=1 // pred_fallthru
      _
    // Predicated region
    $region10: #{tpu_custom_call.1} parent=1 // pred_check
      _
    $region11: #{tpu_custom_call.1} parent=1 // pred_check_branch
      %43 = sbr.rel (0) target = $region13
    $region12: #{tpu_custom_call.1} parent=1 // pred_region
      %45 = vsyncadd [#allocation9], 0
      %s47 = sshll.u32 %s2, 4
      %s48 = int_to_ptr.hbm [resolvable:$true] %s47
      %s49 = sshll.u32 [#allocation8], 4
      %s50 = int_to_ptr.vmem [resolvable:$true] %s49
      %52 = dma.hbm_to_vmem [thread:$0]  %s48, 128, %s50, [#allocation9]
    $region13: #{tpu_custom_call.1} parent=1 // pred_fallthru
      _
    // Predicated region
    $region14: #{tpu_custom_call.1} parent=1 // pred_check
      _
    $region15: #{tpu_custom_call.1} parent=1 // pred_check_branch
      %54 = sbr.rel (0) target = $region17
    $region16: #{tpu_custom_call.1} parent=1 // pred_region
      %56 = vsyncadd [#allocation9], 0
      %s58 = sshll.u32 %s3, 4
      %s59 = int_to_ptr.hbm [resolvable:$true] %s58
      %s60 = sshll.u32 [#allocation10], 4
      %s61 = int_to_ptr.vmem [resolvable:$true] %s60
      %63 = dma.hbm_to_vmem [thread:$0]  %s59, 128, %s61, [#allocation9]
    $region17: #{tpu_custom_call.1} parent=1 // pred_fallthru
      _
    // Predicated region
    $region18: #{tpu_custom_call.1} parent=1 // pred_check
      _
    $region19: #{tpu_custom_call.1} parent=1 // pred_check_branch
      %65 = sbr.rel (0) target = $region21
    $region20: #{tpu_custom_call.1} parent=1 // pred_region
      %67 = vsyncadd [#allocation12], 0
      %s69 = sshll.u32 %s4, 4
      %s70 = int_to_ptr.hbm [resolvable:$true] %s69
      %s71 = sshll.u32 [#allocation11], 4
      %s72 = int_to_ptr.vmem [resolvable:$true] %s71
      %74 = dma.hbm_to_vmem [thread:$0]  %s70, 128, %s72, [#allocation12]
    $region21: #{tpu_custom_call.1} parent=1 // pred_fallthru
      _
    // Predicated region
    $region22: #{tpu_custom_call.1} parent=1 // pred_check
      _
    $region23: #{tpu_custom_call.1} parent=1 // pred_check_branch
      %76 = sbr.rel (0) target = $region25
    $region24: #{tpu_custom_call.1} parent=1 // pred_region
      %78 = vsyncadd [#allocation12], 0
      %s79 = sshll.u32 %s5, 4
      %s80 = int_to_ptr.hbm [resolvable:$true] %s79
      %s81 = sshll.u32 [#allocation13], 4
      %s82 = int_to_ptr.vmem [resolvable:$true] %s81
      %87 = dma.hbm_to_vmem [thread:$0]  %s80, 256, %s82, [#allocation12], 128, 128, 8
    $region25: #{tpu_custom_call.1} parent=1 // pred_fallthru
      _
    // Predicated region
    $region26: #{tpu_custom_call.1} parent=1 // pred_check
      _
    $region27: #{tpu_custom_call.1} parent=1 // pred_check_branch
      %89 = sbr.rel (0) target = $region29
    $region28: #{tpu_custom_call.1} parent=1 // pred_region
      %91 = vsyncadd [#allocation15], 0
      %s92 = sshll.u32 %s6, 4
      %s93 = int_to_ptr.hbm [resolvable:$true] %s92
      %s94 = sshll.u32 [#allocation14], 4
      %s95 = int_to_ptr.vmem [resolvable:$true] %s94
      %100 = dma.hbm_to_vmem [thread:$0]  %s93, 256, %s95, [#allocation15], 128, 128, 8
    $region29: #{tpu_custom_call.1} parent=1 // pred_fallthru
      _
    // Predicated region
    $region30: #{tpu_custom_call.1} parent=1 // pred_check
      _
    $region31: #{tpu_custom_call.1} parent=1 // pred_check_branch
      %102 = sbr.rel (0) target = $region33
    $region32: #{tpu_custom_call.1} parent=1 // pred_region
      %104 = vsyncadd [#allocation15], 0
      %s105 = sshll.u32 %s7, 4
      %s106 = int_to_ptr.hbm [resolvable:$true] %s105
      %s107 = sshll.u32 [#allocation16], 4
      %s108 = int_to_ptr.vmem [resolvable:$true] %s107
      %113 = dma.hbm_to_vmem [thread:$0]  %s106, 256, %s108, [#allocation15], 128, 128, 8
    $region33: #{tpu_custom_call.1} parent=1 // pred_fallthru
      _
    // Predicated region
    $region34: #{tpu_custom_call.1} parent=1 // pred_check
      _
    $region35: #{tpu_custom_call.1} parent=1 // pred_check_branch
      %115 = sbr.rel (0) target = $region37
    $region36: #{tpu_custom_call.1} parent=1 // pred_region
      _
    $region37: #{tpu_custom_call.1} parent=1 // pred_fallthru
      _
    // Predicated region
    $region38: #{tpu_custom_call.1} parent=1 // pred_check
      _
    $region39: #{tpu_custom_call.1} parent=1 // pred_check_branch
      %117 = sbr.rel (0) target = $region41
    $region40: #{tpu_custom_call.1} parent=1 // pred_region
      _
    $region41: #{tpu_custom_call.1} parent=1 // pred_fallthru
      _
    // Predicated region
    $region42: #{tpu_custom_call.1} parent=1 // pred_check
      _
    $region43: #{tpu_custom_call.1} parent=1 // pred_check_branch
      %119 = sbr.rel (0) target = $region45
    $region44: #{tpu_custom_call.1} parent=1 // pred_region
      _
    $region45: #{tpu_custom_call.1} parent=1 // pred_fallthru
      _
    // Predicated region
    $region46: #{tpu_custom_call.1} parent=1 // pred_check
      _
    $region47: #{tpu_custom_call.1} parent=1 // pred_check_branch
      %121 = sbr.rel (0) target = $region49
    $region48: #{tpu_custom_call.1} parent=1 // pred_region
      _
    $region49: #{tpu_custom_call.1} parent=1 // pred_fallthru
      _
    // Predicated region
    $region50: #{tpu_custom_call.1} parent=1 // pred_check
      _
    $region51: #{tpu_custom_call.1} parent=1 // pred_check_branch
      %123 = sbr.rel (0) target = $region53
    $region52: #{tpu_custom_call.1} parent=1 // pred_region
      _
    $region53: #{tpu_custom_call.1} parent=1 // pred_fallthru
      _
    // Predicated region
    $region54: #{tpu_custom_call.1} parent=1 // pred_check
      _
    $region55: #{tpu_custom_call.1} parent=1 // pred_check_branch
      %125 = sbr.rel (0) target = $region57
    $region56: #{tpu_custom_call.1} parent=1 // pred_region
      _
    $region57: #{tpu_custom_call.1} parent=1 // pred_fallthru
      _
    // Predicated region
    $region58: #{tpu_custom_call.1} parent=1 // pred_check
      _
    $region59: #{tpu_custom_call.1} parent=1 // pred_check_branch
      %127 = sbr.rel (0) target = $region61
    $region60: #{tpu_custom_call.1} parent=1 // pred_region
      %129 = vsyncadd [#allocation18], 0
      %s130 = sshll.u32 %s14, 4
      %s131 = int_to_ptr.hbm [resolvable:$true] %s130
      %s132 = sshll.u32 [#allocation17], 4
      %s133 = int_to_ptr.vmem [resolvable:$true] %s132
      %138 = dma.hbm_to_vmem [thread:$0]  %s131, 384, %s133, [#allocation18], 128, 128, 8
    $region61: #{tpu_custom_call.1} parent=1 // pred_fallthru
      _
    // Predicated region
    $region62: #{tpu_custom_call.1} parent=1 // pred_check
      _
    $region63: #{tpu_custom_call.1} parent=1 // pred_check_branch
      %140 = sbr.rel (0) target = $region65
    $region64: #{tpu_custom_call.1} parent=1 // pred_region
      _
    $region65: #{tpu_custom_call.1} parent=1 // pred_fallthru
      _
    // Predicated region
    $region66: #{tpu_custom_call.1} parent=1 // pred_check
      _
    $region67: #{tpu_custom_call.1} parent=1 // pred_check_branch
      %142 = sbr.rel (0) target = $region69
    $region68: #{tpu_custom_call.1} parent=1 // pred_region
      %144 = dma.done [#allocation6], 1024
    $region69: #{tpu_custom_call.1} parent=1 // pred_fallthru
      _
    // Predicated region
    $region70: #{tpu_custom_call.1} parent=1 // pred_check
      _
    $region71: #{tpu_custom_call.1} parent=1 // pred_check_branch
      %146 = sbr.rel (0) target = $region73
    $region72: #{tpu_custom_call.1} parent=1 // pred_region
      %148 = dma.done [#allocation9], 128
    $region73: #{tpu_custom_call.1} parent=1 // pred_fallthru
      _
    // Predicated region
    $region74: #{tpu_custom_call.1} parent=1 // pred_check
      _
    $region75: #{tpu_custom_call.1} parent=1 // pred_check_branch
      %150 = sbr.rel (0) target = $region77
    $region76: #{tpu_custom_call.1} parent=1 // pred_region
      %152 = dma.done [#allocation9], 128
    $region77: #{tpu_custom_call.1} parent=1 // pred_fallthru
      _
    // Predicated region
    $region78: #{tpu_custom_call.1} parent=1 // pred_check
      _
    $region79: #{tpu_custom_call.1} parent=1 // pred_check_branch
      %154 = sbr.rel (0) target = $region81
    $region80: #{tpu_custom_call.1} parent=1 // pred_region
      %156 = dma.done [#allocation12], 128
    $region81: #{tpu_custom_call.1} parent=1 // pred_fallthru
      _
    // Predicated region
    $region82: #{tpu_custom_call.1} parent=1 // pred_check
      _
    $region83: #{tpu_custom_call.1} parent=1 // pred_check_branch
      %158 = sbr.rel (0) target = $region85
    $region84: #{tpu_custom_call.1} parent=1 // pred_region
      %160 = dma.done [#allocation12], 256
    $region85: #{tpu_custom_call.1} parent=1 // pred_fallthru
      _
    // Predicated region
    $region86: #{tpu_custom_call.1} parent=1 // pred_check
      _
    $region87: #{tpu_custom_call.1} parent=1 // pred_check_branch
      %162 = sbr.rel (0) target = $region89
    $region88: #{tpu_custom_call.1} parent=1 // pred_region
      %164 = dma.done [#allocation15], 256
    $region89: #{tpu_custom_call.1} parent=1 // pred_fallthru
      _
    // Predicated region
    $region90: #{tpu_custom_call.1} parent=1 // pred_check
      _
    $region91: #{tpu_custom_call.1} parent=1 // pred_check_branch
      %166 = sbr.rel (0) target = $region93
    $region92: #{tpu_custom_call.1} parent=1 // pred_region
      %168 = dma.done [#allocation15], 256
    $region93: #{tpu_custom_call.1} parent=1 // pred_fallthru
      _
    // Predicated region
    $region94: #{tpu_custom_call.1} parent=1 // pred_check
      _
    $region95: #{tpu_custom_call.1} parent=1 // pred_check_branch
      %170 = sbr.rel (0) target = $region97
    $region96: #{tpu_custom_call.1} parent=1 // pred_region
      %172 = dma.done [#allocation18], 384
    $region97: #{tpu_custom_call.1} parent=1 // pred_fallthru
      _
    %v173 = vld [vmem:[#allocation5] sm:$0xff]
    %v174 = vld [vmem:[#allocation5 + $0x8] sm:$0xff]
    %v175 = vld [vmem:[#allocation5 + $0x10] sm:$0xff]
    %v176 = vld [vmem:[#allocation5 + $0x18] sm:$0xff]
    %v177 = vld [vmem:[#allocation5 + $0x20] sm:$0xff]
    %v178 = vld [vmem:[#allocation5 + $0x28] sm:$0xff]
    %v179 = vld [vmem:[#allocation5 + $0x30] sm:$0xff]
    %v180 = vld [vmem:[#allocation5 + $0x38] sm:$0xff]
    %v181 = vld [vmem:[#allocation8] sm:$0xff]
    %v182 = vld [vmem:[%s8] sm:$0x1]
    %v184 = vperm.slane %v182, 0
    %vm186 = vcmask 64512
    %v188 = vsel %vm186, %v173, 0
    %v191 = vsel %vm186, %v174, 0
    %v194 = vsel %vm186, %v175, 0
    %v197 = vsel %vm186, %v176, 0
    %v200 = vsel %vm186, %v177, 0
    %v203 = vsel %vm186, %v178, 0
    %v206 = vsel %vm186, %v179, 0
    %v209 = vsel %vm186, %v180, 0
    %211 = vmatpush.msra.mxu0 0.0
    %212 = vmatpush.msra.mxu0 0.0
    %213 = vmatpush.msra.mxu0 0.0
    %214 = vmatpush.msra.mxu0 0.0
    %215 = vmatpush.msra.mxu0 0.0
    %216 = vmatpush.msra.mxu0 0.0
    %217 = vmatpush.msra.mxu0 0.0
    %218 = vmatpush.msra.mxu0 0.0
    %219 = vmatpush.msra.mxu0 0.0
    %220 = vmatpush.msra.mxu0 0.0
    %221 = vmatpush.msra.mxu0 0.0
    %222 = vmatpush.msra.mxu0 0.0
    %223 = vmatpush.msra.mxu0 0.0
    %224 = vmatpush.msra.mxu0 0.0
    %225 = vmatpush.msra.mxu0 0.0
    %226 = vmatpush.msra.mxu0 %v181
    %227 = vmatmul.f32.gmra.mxu0 %v188
    %v228 = vpop.f32.mrf.mxu0
    %v229 = vadd.f32 %v184, %v228
    %230 = vmatmul.f32.gmra.mxu0 %v191
    %v231 = vpop.f32.mrf.mxu0
    %v232 = vadd.f32 %v184, %v231
    %233 = vmatmul.f32.gmra.mxu0 %v194
    %v234 = vpop.f32.mrf.mxu0
    %v235 = vadd.f32 %v184, %v234
    %236 = vmatmul.f32.gmra.mxu0 %v197
    %v237 = vpop.f32.mrf.mxu0
    %v238 = vadd.f32 %v184, %v237
    %239 = vmatmul.f32.gmra.mxu0 %v200
    %v240 = vpop.f32.mrf.mxu0
    %v241 = vadd.f32 %v184, %v240
    %242 = vmatmul.f32.gmra.mxu0 %v203
    %v243 = vpop.f32.mrf.mxu0
    %v244 = vadd.f32 %v184, %v243
    %245 = vmatmul.f32.gmra.mxu0 %v206
    %v246 = vpop.f32.mrf.mxu0
    %v247 = vadd.f32 %v184, %v246
    %248 = vmatmul.f32.gmra.mxu0 %v209
    %v249 = vpop.f32.mrf.mxu0
    %v250 = vadd.f32 %v184, %v249
    %251 = vdwg.mxu0
    %vm252 = vcmask 130048
    %253 = vst.msk [vmem:[#allocation2] sm:$0xff] %vm252, %v229
    %254 = vst.msk [vmem:[#allocation2 + $0x8] sm:$0xff] %vm252, %v232
    %255 = vst.msk [vmem:[#allocation2 + $0x10] sm:$0xff] %vm252, %v235
    %256 = vst.msk [vmem:[#allocation2 + $0x18] sm:$0xff] %vm252, %v238
    %257 = vst.msk [vmem:[#allocation2 + $0x20] sm:$0xff] %vm252, %v241
    %258 = vst.msk [vmem:[#allocation2 + $0x28] sm:$0xff] %vm252, %v244
    %259 = vst.msk [vmem:[#allocation2 + $0x30] sm:$0xff] %vm252, %v247
    %260 = vst.msk [vmem:[#allocation2 + $0x38] sm:$0xff] %vm252, %v250
    %v261 = vld [vmem:[#allocation10] sm:$0xff]
    %v262 = vld [vmem:[%s9] sm:$0x1]
    %v264 = vperm.slane %v262, 0
    %266 = vmatpush.msra.mxu0 0.0
    %267 = vmatpush.msra.mxu0 0.0
    %268 = vmatpush.msra.mxu0 0.0
    %269 = vmatpush.msra.mxu0 0.0
    %270 = vmatpush.msra.mxu0 0.0
    %271 = vmatpush.msra.mxu0 0.0
    %272 = vmatpush.msra.mxu0 0.0
    %273 = vmatpush.msra.mxu0 0.0
    %274 = vmatpush.msra.mxu0 0.0
    %275 = vmatpush.msra.mxu0 0.0
    %276 = vmatpush.msra.mxu0 0.0
    %277 = vmatpush.msra.mxu0 0.0
    %278 = vmatpush.msra.mxu0 0.0
    %279 = vmatpush.msra.mxu0 0.0
    %280 = vmatpush.msra.mxu0 0.0
    %281 = vmatpush.msra.mxu0 %v261
    %282 = vmatmul.f32.gmra.mxu0 %v188
    %v283 = vpop.f32.mrf.mxu0
    %v284 = vadd.f32 %v264, %v283
    %285 = vmatmul.f32.gmra.mxu0 %v191
    %v286 = vpop.f32.mrf.mxu0
    %v287 = vadd.f32 %v264, %v286
    %288 = vmatmul.f32.gmra.mxu0 %v194
    %v289 = vpop.f32.mrf.mxu0
    %v290 = vadd.f32 %v264, %v289
    %291 = vmatmul.f32.gmra.mxu0 %v197
    %v292 = vpop.f32.mrf.mxu0
    %v293 = vadd.f32 %v264, %v292
    %294 = vmatmul.f32.gmra.mxu0 %v200
    %v295 = vpop.f32.mrf.mxu0
    %v296 = vadd.f32 %v264, %v295
    %297 = vmatmul.f32.gmra.mxu0 %v203
    %v298 = vpop.f32.mrf.mxu0
    %v299 = vadd.f32 %v264, %v298
    %300 = vmatmul.f32.gmra.mxu0 %v206
    %v301 = vpop.f32.mrf.mxu0
    %v302 = vadd.f32 %v264, %v301
    %303 = vmatmul.f32.gmra.mxu0 %v209
    %v304 = vpop.f32.mrf.mxu0
    %v305 = vadd.f32 %v264, %v304
    %306 = vdwg.mxu0
    %307 = vst.msk [vmem:[#allocation3] sm:$0xff] %vm252, %v284
    %308 = vst.msk [vmem:[#allocation3 + $0x8] sm:$0xff] %vm252, %v287
    %309 = vst.msk [vmem:[#allocation3 + $0x10] sm:$0xff] %vm252, %v290
    %310 = vst.msk [vmem:[#allocation3 + $0x18] sm:$0xff] %vm252, %v293
    %311 = vst.msk [vmem:[#allocation3 + $0x20] sm:$0xff] %vm252, %v296
    %312 = vst.msk [vmem:[#allocation3 + $0x28] sm:$0xff] %vm252, %v299
    %313 = vst.msk [vmem:[#allocation3 + $0x30] sm:$0xff] %vm252, %v302
    %314 = vst.msk [vmem:[#allocation3 + $0x38] sm:$0xff] %vm252, %v305
    %v315 = vld [vmem:[#allocation11] sm:$0xff]
    %v316 = vld [vmem:[%s10] sm:$0x1]
    %v318 = vperm.slane %v316, 0
    %320 = vmatpush.msra.mxu0 0.0
    %321 = vmatpush.msra.mxu0 0.0
    %322 = vmatpush.msra.mxu0 0.0
    %323 = vmatpush.msra.mxu0 0.0
    %324 = vmatpush.msra.mxu0 0.0
    %325 = vmatpush.msra.mxu0 0.0
    %326 = vmatpush.msra.mxu0 0.0
    %327 = vmatpush.msra.mxu0 0.0
    %328 = vmatpush.msra.mxu0 0.0
    %329 = vmatpush.msra.mxu0 0.0
    %330 = vmatpush.msra.mxu0 0.0
    %331 = vmatpush.msra.mxu0 0.0
    %332 = vmatpush.msra.mxu0 0.0
    %333 = vmatpush.msra.mxu0 0.0
    %334 = vmatpush.msra.mxu0 0.0
    %335 = vmatpush.msra.mxu0 %v315
    %336 = vmatmul.f32.gmra.mxu0 %v188
    %v337 = vpop.f32.mrf.mxu0
    %v338 = vadd.f32 %v318, %v337
    %339 = vmatmul.f32.gmra.mxu0 %v191
    %v340 = vpop.f32.mrf.mxu0
    %v341 = vadd.f32 %v318, %v340
    %342 = vmatmul.f32.gmra.mxu0 %v194
    %v343 = vpop.f32.mrf.mxu0
    %v344 = vadd.f32 %v318, %v343
    %345 = vmatmul.f32.gmra.mxu0 %v197
    %v346 = vpop.f32.mrf.mxu0
    %v347 = vadd.f32 %v318, %v346
    %348 = vmatmul.f32.gmra.mxu0 %v200
    %v349 = vpop.f32.mrf.mxu0
    %v350 = vadd.f32 %v318, %v349
    %351 = vmatmul.f32.gmra.mxu0 %v203
    %v352 = vpop.f32.mrf.mxu0
    %v353 = vadd.f32 %v318, %v352
    %354 = vmatmul.f32.gmra.mxu0 %v206
    %v355 = vpop.f32.mrf.mxu0
    %v356 = vadd.f32 %v318, %v355
    %357 = vmatmul.f32.gmra.mxu0 %v209
    %v358 = vpop.f32.mrf.mxu0
    %v359 = vadd.f32 %v318, %v358
    %360 = vdwg.mxu0
    %361 = vst.msk [vmem:[#allocation4] sm:$0xff] %vm252, %v338
    %362 = vst.msk [vmem:[#allocation4 + $0x8] sm:$0xff] %vm252, %v341
    %363 = vst.msk [vmem:[#allocation4 + $0x10] sm:$0xff] %vm252, %v344
    %364 = vst.msk [vmem:[#allocation4 + $0x18] sm:$0xff] %vm252, %v347
    %365 = vst.msk [vmem:[#allocation4 + $0x20] sm:$0xff] %vm252, %v350
    %366 = vst.msk [vmem:[#allocation4 + $0x28] sm:$0xff] %vm252, %v353
    %367 = vst.msk [vmem:[#allocation4 + $0x30] sm:$0xff] %vm252, %v356
    %368 = vst.msk [vmem:[#allocation4 + $0x38] sm:$0xff] %vm252, %v359
    %v369 = vld [vmem:[%s0] sm:$0xff]
    %v370 = vld [vmem:[#allocation13] sm:$0xff]
    %v371 = vld [vmem:[#allocation13 + $0x8] sm:$0xff]
    %v372 = vld [vmem:[#allocation14] sm:$0xff]
    %v373 = vld [vmem:[#allocation14 + $0x8] sm:$0xff]
    %v374 = vld [vmem:[#allocation16] sm:$0xff]
    %v375 = vld [vmem:[#allocation16 + $0x8] sm:$0xff]
    %v376 = vld [vmem:[%s11] sm:$0x1]
    %v378 = vsel %vm252, 0.0, 0
    %380 = vmatpush.msra.mxu0 0.0
    %381 = vmatpush.msra.mxu0 0.0
    %382 = vmatpush.msra.mxu0 0.0
    %383 = vmatpush.msra.mxu0 0.0
    %384 = vmatpush.msra.mxu0 0.0
    %385 = vmatpush.msra.mxu0 0.0
    %386 = vmatpush.msra.mxu0 0.0
    %387 = vmatpush.msra.mxu0 0.0
    %388 = vmatpush.msra.mxu0 0.0
    %389 = vmatpush.msra.mxu0 0.0
    %390 = vmatpush.msra.mxu0 0.0
    %391 = vmatpush.msra.mxu0 0.0
    %392 = vmatpush.msra.mxu0 0.0
    %393 = vmatpush.msra.mxu0 0.0
    %394 = vmatpush.msra.mxu0 %v371
    %395 = vmatpush.msra.mxu0 %v370
    %396 = vmatmul.f32.gmra.mxu0 %v378
    %v397 = vpop.f32.mrf.mxu0
    %v398 = vadd.f32 0.0, %v397
    %399 = vdwg.mxu0
    %400 = vmatpush.msra.mxu0 0.0
    %401 = vmatpush.msra.mxu0 0.0
    %402 = vmatpush.msra.mxu0 0.0
    %403 = vmatpush.msra.mxu0 0.0
    %404 = vmatpush.msra.mxu0 0.0
    %405 = vmatpush.msra.mxu0 0.0
    %406 = vmatpush.msra.mxu0 0.0
    %407 = vmatpush.msra.mxu0 0.0
    %408 = vmatpush.msra.mxu0 0.0
    %409 = vmatpush.msra.mxu0 0.0
    %410 = vmatpush.msra.mxu0 0.0
    %411 = vmatpush.msra.mxu0 0.0
    %412 = vmatpush.msra.mxu0 0.0
    %413 = vmatpush.msra.mxu0 0.0
    %414 = vmatpush.msra.mxu0 %v373
    %415 = vmatpush.msra.mxu0 %v372
    %416 = vmatmul.f32.gmra.mxu0 %v378
    %v417 = vpop.f32.mrf.mxu0
    %v418 = vadd.f32 0.0, %v417
    %419 = vdwg.mxu0
    %v421 = vperm.slane %v376, 0
    %423 = vmatpush.msra.mxu0 0.0
    %424 = vmatpush.msra.mxu0 0.0
    %425 = vmatpush.msra.mxu0 0.0
    %426 = vmatpush.msra.mxu0 0.0
    %427 = vmatpush.msra.mxu0 0.0
    %428 = vmatpush.msra.mxu0 0.0
    %429 = vmatpush.msra.mxu0 0.0
    %430 = vmatpush.msra.mxu0 0.0
    %431 = vmatpush.msra.mxu0 0.0
    %432 = vmatpush.msra.mxu0 0.0
    %433 = vmatpush.msra.mxu0 0.0
    %434 = vmatpush.msra.mxu0 0.0
    %435 = vmatpush.msra.mxu0 0.0
    %436 = vmatpush.msra.mxu0 0.0
    %437 = vmatpush.msra.mxu0 %v375
    %438 = vmatpush.msra.mxu0 %v374
    %439 = vmatmul.f32.gmra.mxu0 %v378
    %v440 = vpop.f32.mrf.mxu0
    %v441 = vadd.f32 %v421, %v440
    %442 = vdwg.mxu0
    %v443 = vld [vmem:[#allocation2] sm:$0xff]
    %v444 = vadd.f32 %v443, %v398
    %v445 = vxor.u32 %v444, 2147483648
    %v446 = vmul.f32 %v445, 1.442695
    %v447 = vpow.pop %v446
    %v448 = vadd.f32 %v447, 1.0
    %v449 = vrcp.pop %v448
    %v450 = vmul.f32 %v448, %v449
    %v451 = vsub.f32 1.0, %v450
    %v452 = vmul.f32 %v449, %v451
    %v453 = vadd.f32 %v449, %v452
    %vm454 = vweird.f32 %v448
    %vm455 = vweird.f32 %v449
    %vm456 = vmor %vm454, %vm455
    %v457 = vsel %vm456, %v449, %v453
    %v458 = vand.u32 2147483647, %v448
    %vm459 = vcmp.eq.f32.partialorder %v458, 8.507059e+37
    %v460 = vand.u32 %v448, 2147483648
    %v461 = vor.u32 1.1754944e-38, %v460
    %v462 = vsel %vm459, %v461, %v457
    %v463 = vmul.f32 1.0, %v462
    %v464 = vld [vmem:[#allocation3] sm:$0xff]
    %v465 = vadd.f32 %v464, %v418
    %v466 = vxor.u32 %v465, 2147483648
    %v467 = vmul.f32 %v466, 1.442695
    %v468 = vpow.pop %v467
    %v469 = vadd.f32 %v468, 1.0
    %v470 = vrcp.pop %v469
    %v471 = vmul.f32 %v469, %v470
    %v472 = vsub.f32 1.0, %v471
    %v473 = vmul.f32 %v470, %v472
    %v474 = vadd.f32 %v470, %v473
    %vm475 = vweird.f32 %v469
    %vm476 = vweird.f32 %v470
    %vm477 = vmor %vm475, %vm476
    %v478 = vsel %vm477, %v470, %v474
    %v479 = vand.u32 2147483647, %v469
    %vm480 = vcmp.eq.f32.partialorder %v479, 8.507059e+37
    %v481 = vand.u32 %v469, 2147483648
    %v482 = vor.u32 1.1754944e-38, %v481
    %v483 = vsel %vm480, %v482, %v478
    %v484 = vmul.f32 1.0, %v483
    %v485 = vld [vmem:[#allocation4] sm:$0xff]
    %v486 = vmul.f32 %v463, %v441
    %v487 = vadd.f32 %v485, %v486
    %v488 = vtanh.pop %v487
    %v489 = vsub.f32 1.0, %v484
    %v490 = vmul.f32 %v489, %v488
    %v491 = vmul.f32 %v484, 0.0
    %v492 = vadd.f32 %v490, %v491
    %vm493 = vcmp.gt.s32.totalorder %v369, 0
    %v494 = vsel %vm493, 1, 0
    %495 = vset.pattern.permute.xlu0 0
    %496 = vperm.xlu0 %495, %v494
    %v497 = vpop.permute.xlu0 %496
    %vm498 = vcmp.eq.s32.totalorder %v497, 1
    %v499 = vsel %vm498, %v492, 0.0
    %v501 = vsel %vm252, %v499, 0
    %503 = vmatpush.msra.mxu0 0.0
    %504 = vmatpush.msra.mxu0 0.0
    %505 = vmatpush.msra.mxu0 0.0
    %506 = vmatpush.msra.mxu0 0.0
    %507 = vmatpush.msra.mxu0 0.0
    %508 = vmatpush.msra.mxu0 0.0
    %509 = vmatpush.msra.mxu0 0.0
    %510 = vmatpush.msra.mxu0 0.0
    %511 = vmatpush.msra.mxu0 0.0
    %512 = vmatpush.msra.mxu0 0.0
    %513 = vmatpush.msra.mxu0 0.0
    %514 = vmatpush.msra.mxu0 0.0
    %515 = vmatpush.msra.mxu0 0.0
    %516 = vmatpush.msra.mxu0 0.0
    %517 = vmatpush.msra.mxu0 %v371
    %518 = vmatpush.msra.mxu0 %v370
    %519 = vmatmul.f32.gmra.mxu0 %v501
    %v520 = vpop.f32.mrf.mxu0
    %v521 = vadd.f32 0.0, %v520
    %522 = vdwg.mxu0
    %523 = vmatpush.msra.mxu0 0.0
    %524 = vmatpush.msra.mxu0 0.0
    %525 = vmatpush.msra.mxu0 0.0
    %526 = vmatpush.msra.mxu0 0.0
    %527 = vmatpush.msra.mxu0 0.0
    %528 = vmatpush.msra.mxu0 0.0
    %529 = vmatpush.msra.mxu0 0.0
    %530 = vmatpush.msra.mxu0 0.0
    %531 = vmatpush.msra.mxu0 0.0
    %532 = vmatpush.msra.mxu0 0.0
    %533 = vmatpush.msra.mxu0 0.0
    %534 = vmatpush.msra.mxu0 0.0
    %535 = vmatpush.msra.mxu0 0.0
    %536 = vmatpush.msra.mxu0 0.0
    %537 = vmatpush.msra.mxu0 %v373
    %538 = vmatpush.msra.mxu0 %v372
    %539 = vmatmul.f32.gmra.mxu0 %v501
    %v540 = vpop.f32.mrf.mxu0
    %v541 = vadd.f32 0.0, %v540
    %542 = vdwg.mxu0
    %543 = vmatpush.msra.mxu0 0.0
    %544 = vmatpush.msra.mxu0 0.0
    %545 = vmatpush.msra.mxu0 0.0
    %546 = vmatpush.msra.mxu0 0.0
    %547 = vmatpush.msra.mxu0 0.0
    %548 = vmatpush.msra.mxu0 0.0
    %549 = vmatpush.msra.mxu0 0.0
    %550 = vmatpush.msra.mxu0 0.0
    %551 = vmatpush.msra.mxu0 0.0
    %552 = vmatpush.msra.mxu0 0.0
    %553 = vmatpush.msra.mxu0 0.0
    %554 = vmatpush.msra.mxu0 0.0
    %555 = vmatpush.msra.mxu0 0.0
    %556 = vmatpush.msra.mxu0 0.0
    %557 = vmatpush.msra.mxu0 %v375
    %558 = vmatpush.msra.mxu0 %v374
    %559 = vmatmul.f32.gmra.mxu0 %v501
    %v560 = vpop.f32.mrf.mxu0
    %v561 = vadd.f32 %v421, %v560
    %562 = vdwg.mxu0
    %s563 = scalar_lea.vmem [#allocation2], 8
    %v564 = vld [vmem:[%s563] sm:$0xff]
    %v565 = vadd.f32 %v564, %v521
    %v566 = vxor.u32 %v565, 2147483648
    %v567 = vmul.f32 %v566, 1.442695
    %v568 = vpow.pop %v567
    %v569 = vadd.f32 %v568, 1.0
    %v570 = vrcp.pop %v569
    %v571 = vmul.f32 %v569, %v570
    %v572 = vsub.f32 1.0, %v571
    %v573 = vmul.f32 %v570, %v572
    %v574 = vadd.f32 %v570, %v573
    %vm575 = vweird.f32 %v569
    %vm576 = vweird.f32 %v570
    %vm577 = vmor %vm575, %vm576
    %v578 = vsel %vm577, %v570, %v574
    %v579 = vand.u32 2147483647, %v569
    %vm580 = vcmp.eq.f32.partialorder %v579, 8.507059e+37
    %v581 = vand.u32 %v569, 2147483648
    %v582 = vor.u32 1.1754944e-38, %v581
    %v583 = vsel %vm580, %v582, %v578
    %v584 = vmul.f32 1.0, %v583
    %s585 = scalar_lea.vmem [#allocation3], 8
    %v586 = vld [vmem:[%s585] sm:$0xff]
    %v587 = vadd.f32 %v586, %v541
    %v588 = vxor.u32 %v587, 2147483648
    %v589 = vmul.f32 %v588, 1.442695
    %v590 = vpow.pop %v589
    %v591 = vadd.f32 %v590, 1.0
    %v592 = vrcp.pop %v591
    %v593 = vmul.f32 %v591, %v592
    %v594 = vsub.f32 1.0, %v593
    %v595 = vmul.f32 %v592, %v594
    %v596 = vadd.f32 %v592, %v595
    %vm597 = vweird.f32 %v591
    %vm598 = vweird.f32 %v592
    %vm599 = vmor %vm597, %vm598
    %v600 = vsel %vm599, %v592, %v596
    %v601 = vand.u32 2147483647, %v591
    %vm602 = vcmp.eq.f32.partialorder %v601, 8.507059e+37
    %v603 = vand.u32 %v591, 2147483648
    %v604 = vor.u32 1.1754944e-38, %v603
    %v605 = vsel %vm602, %v604, %v600
    %v606 = vmul.f32 1.0, %v605
    %s607 = scalar_lea.vmem [#allocation4], 8
    %v608 = vld [vmem:[%s607] sm:$0xff]
    %v609 = vmul.f32 %v584, %v561
    %v610 = vadd.f32 %v608, %v609
    %v611 = vtanh.pop %v610
    %v612 = vsub.f32 1.0, %v606
    %v613 = vmul.f32 %v612, %v611
    %v614 = vmul.f32 %v606, %v499
    %v615 = vadd.f32 %v613, %v614
    %vm616 = vcmp.gt.s32.totalorder %v369, 1
    %v617 = vsel %vm616, 1, 0
    %618 = vset.pattern.permute.xlu0 0
    %619 = vperm.xlu0 %618, %v617
    %v620 = vpop.permute.xlu0 %619
    %vm621 = vcmp.eq.s32.totalorder %v620, 1
    %v622 = vsel %vm621, %v615, %v499
    %v624 = vsel %vm252, %v622, 0
    %626 = vmatpush.msra.mxu0 0.0
    %627 = vmatpush.msra.mxu0 0.0
    %628 = vmatpush.msra.mxu0 0.0
    %629 = vmatpush.msra.mxu0 0.0
    %630 = vmatpush.msra.mxu0 0.0
    %631 = vmatpush.msra.mxu0 0.0
    %632 = vmatpush.msra.mxu0 0.0
    %633 = vmatpush.msra.mxu0 0.0
    %634 = vmatpush.msra.mxu0 0.0
    %635 = vmatpush.msra.mxu0 0.0
    %636 = vmatpush.msra.mxu0 0.0
    %637 = vmatpush.msra.mxu0 0.0
    %638 = vmatpush.msra.mxu0 0.0
    %639 = vmatpush.msra.mxu0 0.0
    %640 = vmatpush.msra.mxu0 %v371
    %641 = vmatpush.msra.mxu0 %v370
    %642 = vmatmul.f32.gmra.mxu0 %v624
    %v643 = vpop.f32.mrf.mxu0
    %v644 = vadd.f32 0.0, %v643
    %645 = vdwg.mxu0
    %646 = vmatpush.msra.mxu0 0.0
    %647 = vmatpush.msra.mxu0 0.0
    %648 = vmatpush.msra.mxu0 0.0
    %649 = vmatpush.msra.mxu0 0.0
    %650 = vmatpush.msra.mxu0 0.0
    %651 = vmatpush.msra.mxu0 0.0
    %652 = vmatpush.msra.mxu0 0.0
    %653 = vmatpush.msra.mxu0 0.0
    %654 = vmatpush.msra.mxu0 0.0
    %655 = vmatpush.msra.mxu0 0.0
    %656 = vmatpush.msra.mxu0 0.0
    %657 = vmatpush.msra.mxu0 0.0
    %658 = vmatpush.msra.mxu0 0.0
    %659 = vmatpush.msra.mxu0 0.0
    %660 = vmatpush.msra.mxu0 %v373
    %661 = vmatpush.msra.mxu0 %v372
    %662 = vmatmul.f32.gmra.mxu0 %v624
    %v663 = vpop.f32.mrf.mxu0
    %v664 = vadd.f32 0.0, %v663
    %665 = vdwg.mxu0
    %666 = vmatpush.msra.mxu0 0.0
    %667 = vmatpush.msra.mxu0 0.0
    %668 = vmatpush.msra.mxu0 0.0
    %669 = vmatpush.msra.mxu0 0.0
    %670 = vmatpush.msra.mxu0 0.0
    %671 = vmatpush.msra.mxu0 0.0
    %672 = vmatpush.msra.mxu0 0.0
    %673 = vmatpush.msra.mxu0 0.0
    %674 = vmatpush.msra.mxu0 0.0
    %675 = vmatpush.msra.mxu0 0.0
    %676 = vmatpush.msra.mxu0 0.0
    %677 = vmatpush.msra.mxu0 0.0
    %678 = vmatpush.msra.mxu0 0.0
    %679 = vmatpush.msra.mxu0 0.0
    %680 = vmatpush.msra.mxu0 %v375
    %681 = vmatpush.msra.mxu0 %v374
    %682 = vmatmul.f32.gmra.mxu0 %v624
    %v683 = vpop.f32.mrf.mxu0
    %v684 = vadd.f32 %v421, %v683
    %685 = vdwg.mxu0
    %s686 = scalar_lea.vmem [#allocation2], 16
    %v687 = vld [vmem:[%s686] sm:$0xff]
    %v688 = vadd.f32 %v687, %v644
    %v689 = vxor.u32 %v688, 2147483648
    %v690 = vmul.f32 %v689, 1.442695
    %v691 = vpow.pop %v690
    %v692 = vadd.f32 %v691, 1.0
    %v693 = vrcp.pop %v692
    %v694 = vmul.f32 %v692, %v693
    %v695 = vsub.f32 1.0, %v694
    %v696 = vmul.f32 %v693, %v695
    %v697 = vadd.f32 %v693, %v696
    %vm698 = vweird.f32 %v692
    %vm699 = vweird.f32 %v693
    %vm700 = vmor %vm698, %vm699
    %v701 = vsel %vm700, %v693, %v697
    %v702 = vand.u32 2147483647, %v692
    %vm703 = vcmp.eq.f32.partialorder %v702, 8.507059e+37
    %v704 = vand.u32 %v692, 2147483648
    %v705 = vor.u32 1.1754944e-38, %v704
    %v706 = vsel %vm703, %v705, %v701
    %v707 = vmul.f32 1.0, %v706
    %s708 = scalar_lea.vmem [#allocation3], 16
    %v709 = vld [vmem:[%s708] sm:$0xff]
    %v710 = vadd.f32 %v709, %v664
    %v711 = vxor.u32 %v710, 2147483648
    %v712 = vmul.f32 %v711, 1.442695
    %v713 = vpow.pop %v712
    %v714 = vadd.f32 %v713, 1.0
    %v715 = vrcp.pop %v714
    %v716 = vmul.f32 %v714, %v715
    %v717 = vsub.f32 1.0, %v716
    %v718 = vmul.f32 %v715, %v717
    %v719 = vadd.f32 %v715, %v718
    %vm720 = vweird.f32 %v714
    %vm721 = vweird.f32 %v715
    %vm722 = vmor %vm720, %vm721
    %v723 = vsel %vm722, %v715, %v719
    %v724 = vand.u32 2147483647, %v714
    %vm725 = vcmp.eq.f32.partialorder %v724, 8.507059e+37
    %v726 = vand.u32 %v714, 2147483648
    %v727 = vor.u32 1.1754944e-38, %v726
    %v728 = vsel %vm725, %v727, %v723
    %v729 = vmul.f32 1.0, %v728
    %s730 = scalar_lea.vmem [#allocation4], 16
    %v731 = vld [vmem:[%s730] sm:$0xff]
    %v732 = vmul.f32 %v707, %v684
    %v733 = vadd.f32 %v731, %v732
    %v734 = vtanh.pop %v733
    %v735 = vsub.f32 1.0, %v729
    %v736 = vmul.f32 %v735, %v734
    %v737 = vmul.f32 %v729, %v622
    %v738 = vadd.f32 %v736, %v737
    %vm739 = vcmp.gt.s32.totalorder %v369, 2
    %v740 = vsel %vm739, 1, 0
    %741 = vset.pattern.permute.xlu0 0
    %742 = vperm.xlu0 %741, %v740
    %v743 = vpop.permute.xlu0 %742
    %vm744 = vcmp.eq.s32.totalorder %v743, 1
    %v745 = vsel %vm744, %v738, %v622
    %v747 = vsel %vm252, %v745, 0
    %749 = vmatpush.msra.mxu0 0.0
    %750 = vmatpush.msra.mxu0 0.0
    %751 = vmatpush.msra.mxu0 0.0
    %752 = vmatpush.msra.mxu0 0.0
    %753 = vmatpush.msra.mxu0 0.0
    %754 = vmatpush.msra.mxu0 0.0
    %755 = vmatpush.msra.mxu0 0.0
    %756 = vmatpush.msra.mxu0 0.0
    %757 = vmatpush.msra.mxu0 0.0
    %758 = vmatpush.msra.mxu0 0.0
    %759 = vmatpush.msra.mxu0 0.0
    %760 = vmatpush.msra.mxu0 0.0
    %761 = vmatpush.msra.mxu0 0.0
    %762 = vmatpush.msra.mxu0 0.0
    %763 = vmatpush.msra.mxu0 %v371
    %764 = vmatpush.msra.mxu0 %v370
    %765 = vmatmul.f32.gmra.mxu0 %v747
    %v766 = vpop.f32.mrf.mxu0
    %v767 = vadd.f32 0.0, %v766
    %768 = vdwg.mxu0
    %769 = vmatpush.msra.mxu0 0.0
    %770 = vmatpush.msra.mxu0 0.0
    %771 = vmatpush.msra.mxu0 0.0
    %772 = vmatpush.msra.mxu0 0.0
    %773 = vmatpush.msra.mxu0 0.0
    %774 = vmatpush.msra.mxu0 0.0
    %775 = vmatpush.msra.mxu0 0.0
    %776 = vmatpush.msra.mxu0 0.0
    %777 = vmatpush.msra.mxu0 0.0
    %778 = vmatpush.msra.mxu0 0.0
    %779 = vmatpush.msra.mxu0 0.0
    %780 = vmatpush.msra.mxu0 0.0
    %781 = vmatpush.msra.mxu0 0.0
    %782 = vmatpush.msra.mxu0 0.0
    %783 = vmatpush.msra.mxu0 %v373
    %784 = vmatpush.msra.mxu0 %v372
    %785 = vmatmul.f32.gmra.mxu0 %v747
    %v786 = vpop.f32.mrf.mxu0
    %v787 = vadd.f32 0.0, %v786
    %788 = vdwg.mxu0
    %789 = vmatpush.msra.mxu0 0.0
    %790 = vmatpush.msra.mxu0 0.0
    %791 = vmatpush.msra.mxu0 0.0
    %792 = vmatpush.msra.mxu0 0.0
    %793 = vmatpush.msra.mxu0 0.0
    %794 = vmatpush.msra.mxu0 0.0
    %795 = vmatpush.msra.mxu0 0.0
    %796 = vmatpush.msra.mxu0 0.0
    %797 = vmatpush.msra.mxu0 0.0
    %798 = vmatpush.msra.mxu0 0.0
    %799 = vmatpush.msra.mxu0 0.0
    %800 = vmatpush.msra.mxu0 0.0
    %801 = vmatpush.msra.mxu0 0.0
    %802 = vmatpush.msra.mxu0 0.0
    %803 = vmatpush.msra.mxu0 %v375
    %804 = vmatpush.msra.mxu0 %v374
    %805 = vmatmul.f32.gmra.mxu0 %v747
    %v806 = vpop.f32.mrf.mxu0
    %v807 = vadd.f32 %v421, %v806
    %808 = vdwg.mxu0
    %s809 = scalar_lea.vmem [#allocation2], 24
    %v810 = vld [vmem:[%s809] sm:$0xff]
    %v811 = vadd.f32 %v810, %v767
    %v812 = vxor.u32 %v811, 2147483648
    %v813 = vmul.f32 %v812, 1.442695
    %v814 = vpow.pop %v813
    %v815 = vadd.f32 %v814, 1.0
    %v816 = vrcp.pop %v815
    %v817 = vmul.f32 %v815, %v816
    %v818 = vsub.f32 1.0, %v817
    %v819 = vmul.f32 %v816, %v818
    %v820 = vadd.f32 %v816, %v819
    %vm821 = vweird.f32 %v815
    %vm822 = vweird.f32 %v816
    %vm823 = vmor %vm821, %vm822
    %v824 = vsel %vm823, %v816, %v820
    %v825 = vand.u32 2147483647, %v815
    %vm826 = vcmp.eq.f32.partialorder %v825, 8.507059e+37
    %v827 = vand.u32 %v815, 2147483648
    %v828 = vor.u32 1.1754944e-38, %v827
    %v829 = vsel %vm826, %v828, %v824
    %v830 = vmul.f32 1.0, %v829
    %s831 = scalar_lea.vmem [#allocation3], 24
    %v832 = vld [vmem:[%s831] sm:$0xff]
    %v833 = vadd.f32 %v832, %v787
    %v834 = vxor.u32 %v833, 2147483648
    %v835 = vmul.f32 %v834, 1.442695
    %v836 = vpow.pop %v835
    %v837 = vadd.f32 %v836, 1.0
    %v838 = vrcp.pop %v837
    %v839 = vmul.f32 %v837, %v838
    %v840 = vsub.f32 1.0, %v839
    %v841 = vmul.f32 %v838, %v840
    %v842 = vadd.f32 %v838, %v841
    %vm843 = vweird.f32 %v837
    %vm844 = vweird.f32 %v838
    %vm845 = vmor %vm843, %vm844
    %v846 = vsel %vm845, %v838, %v842
    %v847 = vand.u32 2147483647, %v837
    %vm848 = vcmp.eq.f32.partialorder %v847, 8.507059e+37
    %v849 = vand.u32 %v837, 2147483648
    %v850 = vor.u32 1.1754944e-38, %v849
    %v851 = vsel %vm848, %v850, %v846
    %v852 = vmul.f32 1.0, %v851
    %s853 = scalar_lea.vmem [#allocation4], 24
    %v854 = vld [vmem:[%s853] sm:$0xff]
    %v855 = vmul.f32 %v830, %v807
    %v856 = vadd.f32 %v854, %v855
    %v857 = vtanh.pop %v856
    %v858 = vsub.f32 1.0, %v852
    %v859 = vmul.f32 %v858, %v857
    %v860 = vmul.f32 %v852, %v745
    %v861 = vadd.f32 %v859, %v860
    %vm862 = vcmp.gt.s32.totalorder %v369, 3
    %v863 = vsel %vm862, 1, 0
    %864 = vset.pattern.permute.xlu0 0
    %865 = vperm.xlu0 %864, %v863
    %v866 = vpop.permute.xlu0 %865
    %vm867 = vcmp.eq.s32.totalorder %v866, 1
    %v868 = vsel %vm867, %v861, %v745
    %v870 = vsel %vm252, %v868, 0
    %872 = vmatpush.msra.mxu0 0.0
    %873 = vmatpush.msra.mxu0 0.0
    %874 = vmatpush.msra.mxu0 0.0
    %875 = vmatpush.msra.mxu0 0.0
    %876 = vmatpush.msra.mxu0 0.0
    %877 = vmatpush.msra.mxu0 0.0
    %878 = vmatpush.msra.mxu0 0.0
    %879 = vmatpush.msra.mxu0 0.0
    %880 = vmatpush.msra.mxu0 0.0
    %881 = vmatpush.msra.mxu0 0.0
    %882 = vmatpush.msra.mxu0 0.0
    %883 = vmatpush.msra.mxu0 0.0
    %884 = vmatpush.msra.mxu0 0.0
    %885 = vmatpush.msra.mxu0 0.0
    %886 = vmatpush.msra.mxu0 %v371
    %887 = vmatpush.msra.mxu0 %v370
    %888 = vmatmul.f32.gmra.mxu0 %v870
    %v889 = vpop.f32.mrf.mxu0
    %v890 = vadd.f32 0.0, %v889
    %891 = vdwg.mxu0
    %892 = vmatpush.msra.mxu0 0.0
    %893 = vmatpush.msra.mxu0 0.0
    %894 = vmatpush.msra.mxu0 0.0
    %895 = vmatpush.msra.mxu0 0.0
    %896 = vmatpush.msra.mxu0 0.0
    %897 = vmatpush.msra.mxu0 0.0
    %898 = vmatpush.msra.mxu0 0.0
    %899 = vmatpush.msra.mxu0 0.0
    %900 = vmatpush.msra.mxu0 0.0
    %901 = vmatpush.msra.mxu0 0.0
    %902 = vmatpush.msra.mxu0 0.0
    %903 = vmatpush.msra.mxu0 0.0
    %904 = vmatpush.msra.mxu0 0.0
    %905 = vmatpush.msra.mxu0 0.0
    %906 = vmatpush.msra.mxu0 %v373
    %907 = vmatpush.msra.mxu0 %v372
    %908 = vmatmul.f32.gmra.mxu0 %v870
    %v909 = vpop.f32.mrf.mxu0
    %v910 = vadd.f32 0.0, %v909
    %911 = vdwg.mxu0
    %912 = vmatpush.msra.mxu0 0.0
    %913 = vmatpush.msra.mxu0 0.0
    %914 = vmatpush.msra.mxu0 0.0
    %915 = vmatpush.msra.mxu0 0.0
    %916 = vmatpush.msra.mxu0 0.0
    %917 = vmatpush.msra.mxu0 0.0
    %918 = vmatpush.msra.mxu0 0.0
    %919 = vmatpush.msra.mxu0 0.0
    %920 = vmatpush.msra.mxu0 0.0
    %921 = vmatpush.msra.mxu0 0.0
    %922 = vmatpush.msra.mxu0 0.0
    %923 = vmatpush.msra.mxu0 0.0
    %924 = vmatpush.msra.mxu0 0.0
    %925 = vmatpush.msra.mxu0 0.0
    %926 = vmatpush.msra.mxu0 %v375
    %927 = vmatpush.msra.mxu0 %v374
    %928 = vmatmul.f32.gmra.mxu0 %v870
    %v929 = vpop.f32.mrf.mxu0
    %v930 = vadd.f32 %v421, %v929
    %931 = vdwg.mxu0
    %s932 = scalar_lea.vmem [#allocation2], 32
    %v933 = vld [vmem:[%s932] sm:$0xff]
    %v934 = vadd.f32 %v933, %v890
    %v935 = vxor.u32 %v934, 2147483648
    %v936 = vmul.f32 %v935, 1.442695
    %v937 = vpow.pop %v936
    %v938 = vadd.f32 %v937, 1.0
    %v939 = vrcp.pop %v938
    %v940 = vmul.f32 %v938, %v939
    %v941 = vsub.f32 1.0, %v940
    %v942 = vmul.f32 %v939, %v941
    %v943 = vadd.f32 %v939, %v942
    %vm944 = vweird.f32 %v938
    %vm945 = vweird.f32 %v939
    %vm946 = vmor %vm944, %vm945
    %v947 = vsel %vm946, %v939, %v943
    %v948 = vand.u32 2147483647, %v938
    %vm949 = vcmp.eq.f32.partialorder %v948, 8.507059e+37
    %v950 = vand.u32 %v938, 2147483648
    %v951 = vor.u32 1.1754944e-38, %v950
    %v952 = vsel %vm949, %v951, %v947
    %v953 = vmul.f32 1.0, %v952
    %s954 = scalar_lea.vmem [#allocation3], 32
    %v955 = vld [vmem:[%s954] sm:$0xff]
    %v956 = vadd.f32 %v955, %v910
    %v957 = vxor.u32 %v956, 2147483648
    %v958 = vmul.f32 %v957, 1.442695
    %v959 = vpow.pop %v958
    %v960 = vadd.f32 %v959, 1.0
    %v961 = vrcp.pop %v960
    %v962 = vmul.f32 %v960, %v961
    %v963 = vsub.f32 1.0, %v962
    %v964 = vmul.f32 %v961, %v963
    %v965 = vadd.f32 %v961, %v964
    %vm966 = vweird.f32 %v960
    %vm967 = vweird.f32 %v961
    %vm968 = vmor %vm966, %vm967
    %v969 = vsel %vm968, %v961, %v965
    %v970 = vand.u32 2147483647, %v960
    %vm971 = vcmp.eq.f32.partialorder %v970, 8.507059e+37
    %v972 = vand.u32 %v960, 2147483648
    %v973 = vor.u32 1.1754944e-38, %v972
    %v974 = vsel %vm971, %v973, %v969
    %v975 = vmul.f32 1.0, %v974
    %s976 = scalar_lea.vmem [#allocation4], 32
    %v977 = vld [vmem:[%s976] sm:$0xff]
    %v978 = vmul.f32 %v953, %v930
    %v979 = vadd.f32 %v977, %v978
    %v980 = vtanh.pop %v979
    %v981 = vsub.f32 1.0, %v975
    %v982 = vmul.f32 %v981, %v980
    %v983 = vmul.f32 %v975, %v868
    %v984 = vadd.f32 %v982, %v983
    %vm985 = vcmp.gt.s32.totalorder %v369, 4
    %v986 = vsel %vm985, 1, 0
    %987 = vset.pattern.permute.xlu0 0
    %988 = vperm.xlu0 %987, %v986
    %v989 = vpop.permute.xlu0 %988
    %vm990 = vcmp.eq.s32.totalorder %v989, 1
    %v991 = vsel %vm990, %v984, %v868
    %v993 = vsel %vm252, %v991, 0
    %995 = vmatpush.msra.mxu0 0.0
    %996 = vmatpush.msra.mxu0 0.0
    %997 = vmatpush.msra.mxu0 0.0
    %998 = vmatpush.msra.mxu0 0.0
    %999 = vmatpush.msra.mxu0 0.0
    %1000 = vmatpush.msra.mxu0 0.0
    %1001 = vmatpush.msra.mxu0 0.0
    %1002 = vmatpush.msra.mxu0 0.0
    %1003 = vmatpush.msra.mxu0 0.0
    %1004 = vmatpush.msra.mxu0 0.0
    %1005 = vmatpush.msra.mxu0 0.0
    %1006 = vmatpush.msra.mxu0 0.0
    %1007 = vmatpush.msra.mxu0 0.0
    %1008 = vmatpush.msra.mxu0 0.0
    %1009 = vmatpush.msra.mxu0 %v371
    %1010 = vmatpush.msra.mxu0 %v370
    %1011 = vmatmul.f32.gmra.mxu0 %v993
    %v1012 = vpop.f32.mrf.mxu0
    %v1013 = vadd.f32 0.0, %v1012
    %1014 = vdwg.mxu0
    %1015 = vmatpush.msra.mxu0 0.0
    %1016 = vmatpush.msra.mxu0 0.0
    %1017 = vmatpush.msra.mxu0 0.0
    %1018 = vmatpush.msra.mxu0 0.0
    %1019 = vmatpush.msra.mxu0 0.0
    %1020 = vmatpush.msra.mxu0 0.0
    %1021 = vmatpush.msra.mxu0 0.0
    %1022 = vmatpush.msra.mxu0 0.0
    %1023 = vmatpush.msra.mxu0 0.0
    %1024 = vmatpush.msra.mxu0 0.0
    %1025 = vmatpush.msra.mxu0 0.0
    %1026 = vmatpush.msra.mxu0 0.0
    %1027 = vmatpush.msra.mxu0 0.0
    %1028 = vmatpush.msra.mxu0 0.0
    %1029 = vmatpush.msra.mxu0 %v373
    %1030 = vmatpush.msra.mxu0 %v372
    %1031 = vmatmul.f32.gmra.mxu0 %v993
    %v1032 = vpop.f32.mrf.mxu0
    %v1033 = vadd.f32 0.0, %v1032
    %1034 = vdwg.mxu0
    %1035 = vmatpush.msra.mxu0 0.0
    %1036 = vmatpush.msra.mxu0 0.0
    %1037 = vmatpush.msra.mxu0 0.0
    %1038 = vmatpush.msra.mxu0 0.0
    %1039 = vmatpush.msra.mxu0 0.0
    %1040 = vmatpush.msra.mxu0 0.0
    %1041 = vmatpush.msra.mxu0 0.0
    %1042 = vmatpush.msra.mxu0 0.0
    %1043 = vmatpush.msra.mxu0 0.0
    %1044 = vmatpush.msra.mxu0 0.0
    %1045 = vmatpush.msra.mxu0 0.0
    %1046 = vmatpush.msra.mxu0 0.0
    %1047 = vmatpush.msra.mxu0 0.0
    %1048 = vmatpush.msra.mxu0 0.0
    %1049 = vmatpush.msra.mxu0 %v375
    %1050 = vmatpush.msra.mxu0 %v374
    %1051 = vmatmul.f32.gmra.mxu0 %v993
    %v1052 = vpop.f32.mrf.mxu0
    %v1053 = vadd.f32 %v421, %v1052
    %1054 = vdwg.mxu0
    %s1055 = scalar_lea.vmem [#allocation2], 40
    %v1056 = vld [vmem:[%s1055] sm:$0xff]
    %v1057 = vadd.f32 %v1056, %v1013
    %v1058 = vxor.u32 %v1057, 2147483648
    %v1059 = vmul.f32 %v1058, 1.442695
    %v1060 = vpow.pop %v1059
    %v1061 = vadd.f32 %v1060, 1.0
    %v1062 = vrcp.pop %v1061
    %v1063 = vmul.f32 %v1061, %v1062
    %v1064 = vsub.f32 1.0, %v1063
    %v1065 = vmul.f32 %v1062, %v1064
    %v1066 = vadd.f32 %v1062, %v1065
    %vm1067 = vweird.f32 %v1061
    %vm1068 = vweird.f32 %v1062
    %vm1069 = vmor %vm1067, %vm1068
    %v1070 = vsel %vm1069, %v1062, %v1066
    %v1071 = vand.u32 2147483647, %v1061
    %vm1072 = vcmp.eq.f32.partialorder %v1071, 8.507059e+37
    %v1073 = vand.u32 %v1061, 2147483648
    %v1074 = vor.u32 1.1754944e-38, %v1073
    %v1075 = vsel %vm1072, %v1074, %v1070
    %v1076 = vmul.f32 1.0, %v1075
    %s1077 = scalar_lea.vmem [#allocation3], 40
    %v1078 = vld [vmem:[%s1077] sm:$0xff]
    %v1079 = vadd.f32 %v1078, %v1033
    %v1080 = vxor.u32 %v1079, 2147483648
    %v1081 = vmul.f32 %v1080, 1.442695
    %v1082 = vpow.pop %v1081
    %v1083 = vadd.f32 %v1082, 1.0
    %v1084 = vrcp.pop %v1083
    %v1085 = vmul.f32 %v1083, %v1084
    %v1086 = vsub.f32 1.0, %v1085
    %v1087 = vmul.f32 %v1084, %v1086
    %v1088 = vadd.f32 %v1084, %v1087
    %vm1089 = vweird.f32 %v1083
    %vm1090 = vweird.f32 %v1084
    %vm1091 = vmor %vm1089, %vm1090
    %v1092 = vsel %vm1091, %v1084, %v1088
    %v1093 = vand.u32 2147483647, %v1083
    %vm1094 = vcmp.eq.f32.partialorder %v1093, 8.507059e+37
    %v1095 = vand.u32 %v1083, 2147483648
    %v1096 = vor.u32 1.1754944e-38, %v1095
    %v1097 = vsel %vm1094, %v1096, %v1092
    %v1098 = vmul.f32 1.0, %v1097
    %s1099 = scalar_lea.vmem [#allocation4], 40
    %v1100 = vld [vmem:[%s1099] sm:$0xff]
    %v1101 = vmul.f32 %v1076, %v1053
    %v1102 = vadd.f32 %v1100, %v1101
    %v1103 = vtanh.pop %v1102
    %v1104 = vsub.f32 1.0, %v1098
    %v1105 = vmul.f32 %v1104, %v1103
    %v1106 = vmul.f32 %v1098, %v991
    %v1107 = vadd.f32 %v1105, %v1106
    %vm1108 = vcmp.gt.s32.totalorder %v369, 5
    %v1109 = vsel %vm1108, 1, 0
    %1110 = vset.pattern.permute.xlu0 0
    %1111 = vperm.xlu0 %1110, %v1109
    %v1112 = vpop.permute.xlu0 %1111
    %vm1113 = vcmp.eq.s32.totalorder %v1112, 1
    %v1114 = vsel %vm1113, %v1107, %v991
    %v1116 = vsel %vm252, %v1114, 0
    %1118 = vmatpush.msra.mxu0 0.0
    %1119 = vmatpush.msra.mxu0 0.0
    %1120 = vmatpush.msra.mxu0 0.0
    %1121 = vmatpush.msra.mxu0 0.0
    %1122 = vmatpush.msra.mxu0 0.0
    %1123 = vmatpush.msra.mxu0 0.0
    %1124 = vmatpush.msra.mxu0 0.0
    %1125 = vmatpush.msra.mxu0 0.0
    %1126 = vmatpush.msra.mxu0 0.0
    %1127 = vmatpush.msra.mxu0 0.0
    %1128 = vmatpush.msra.mxu0 0.0
    %1129 = vmatpush.msra.mxu0 0.0
    %1130 = vmatpush.msra.mxu0 0.0
    %1131 = vmatpush.msra.mxu0 0.0
    %1132 = vmatpush.msra.mxu0 %v371
    %1133 = vmatpush.msra.mxu0 %v370
    %1134 = vmatmul.f32.gmra.mxu0 %v1116
    %v1135 = vpop.f32.mrf.mxu0
    %v1136 = vadd.f32 0.0, %v1135
    %1137 = vdwg.mxu0
    %1138 = vmatpush.msra.mxu0 0.0
    %1139 = vmatpush.msra.mxu0 0.0
    %1140 = vmatpush.msra.mxu0 0.0
    %1141 = vmatpush.msra.mxu0 0.0
    %1142 = vmatpush.msra.mxu0 0.0
    %1143 = vmatpush.msra.mxu0 0.0
    %1144 = vmatpush.msra.mxu0 0.0
    %1145 = vmatpush.msra.mxu0 0.0
    %1146 = vmatpush.msra.mxu0 0.0
    %1147 = vmatpush.msra.mxu0 0.0
    %1148 = vmatpush.msra.mxu0 0.0
    %1149 = vmatpush.msra.mxu0 0.0
    %1150 = vmatpush.msra.mxu0 0.0
    %1151 = vmatpush.msra.mxu0 0.0
    %1152 = vmatpush.msra.mxu0 %v373
    %1153 = vmatpush.msra.mxu0 %v372
    %1154 = vmatmul.f32.gmra.mxu0 %v1116
    %v1155 = vpop.f32.mrf.mxu0
    %v1156 = vadd.f32 0.0, %v1155
    %1157 = vdwg.mxu0
    %1158 = vmatpush.msra.mxu0 0.0
    %1159 = vmatpush.msra.mxu0 0.0
    %1160 = vmatpush.msra.mxu0 0.0
    %1161 = vmatpush.msra.mxu0 0.0
    %1162 = vmatpush.msra.mxu0 0.0
    %1163 = vmatpush.msra.mxu0 0.0
    %1164 = vmatpush.msra.mxu0 0.0
    %1165 = vmatpush.msra.mxu0 0.0
    %1166 = vmatpush.msra.mxu0 0.0
    %1167 = vmatpush.msra.mxu0 0.0
    %1168 = vmatpush.msra.mxu0 0.0
    %1169 = vmatpush.msra.mxu0 0.0
    %1170 = vmatpush.msra.mxu0 0.0
    %1171 = vmatpush.msra.mxu0 0.0
    %1172 = vmatpush.msra.mxu0 %v375
    %1173 = vmatpush.msra.mxu0 %v374
    %1174 = vmatmul.f32.gmra.mxu0 %v1116
    %v1175 = vpop.f32.mrf.mxu0
    %v1176 = vadd.f32 %v421, %v1175
    %1177 = vdwg.mxu0
    %s1178 = scalar_lea.vmem [#allocation2], 48
    %v1179 = vld [vmem:[%s1178] sm:$0xff]
    %v1180 = vadd.f32 %v1179, %v1136
    %v1181 = vxor.u32 %v1180, 2147483648
    %v1182 = vmul.f32 %v1181, 1.442695
    %v1183 = vpow.pop %v1182
    %v1184 = vadd.f32 %v1183, 1.0
    %v1185 = vrcp.pop %v1184
    %v1186 = vmul.f32 %v1184, %v1185
    %v1187 = vsub.f32 1.0, %v1186
    %v1188 = vmul.f32 %v1185, %v1187
    %v1189 = vadd.f32 %v1185, %v1188
    %vm1190 = vweird.f32 %v1184
    %vm1191 = vweird.f32 %v1185
    %vm1192 = vmor %vm1190, %vm1191
    %v1193 = vsel %vm1192, %v1185, %v1189
    %v1194 = vand.u32 2147483647, %v1184
    %vm1195 = vcmp.eq.f32.partialorder %v1194, 8.507059e+37
    %v1196 = vand.u32 %v1184, 2147483648
    %v1197 = vor.u32 1.1754944e-38, %v1196
    %v1198 = vsel %vm1195, %v1197, %v1193
    %v1199 = vmul.f32 1.0, %v1198
    %s1200 = scalar_lea.vmem [#allocation3], 48
    %v1201 = vld [vmem:[%s1200] sm:$0xff]
    %v1202 = vadd.f32 %v1201, %v1156
    %v1203 = vxor.u32 %v1202, 2147483648
    %v1204 = vmul.f32 %v1203, 1.442695
    %v1205 = vpow.pop %v1204
    %v1206 = vadd.f32 %v1205, 1.0
    %v1207 = vrcp.pop %v1206
    %v1208 = vmul.f32 %v1206, %v1207
    %v1209 = vsub.f32 1.0, %v1208
    %v1210 = vmul.f32 %v1207, %v1209
    %v1211 = vadd.f32 %v1207, %v1210
    %vm1212 = vweird.f32 %v1206
    %vm1213 = vweird.f32 %v1207
    %vm1214 = vmor %vm1212, %vm1213
    %v1215 = vsel %vm1214, %v1207, %v1211
    %v1216 = vand.u32 2147483647, %v1206
    %vm1217 = vcmp.eq.f32.partialorder %v1216, 8.507059e+37
    %v1218 = vand.u32 %v1206, 2147483648
    %v1219 = vor.u32 1.1754944e-38, %v1218
    %v1220 = vsel %vm1217, %v1219, %v1215
    %v1221 = vmul.f32 1.0, %v1220
    %s1222 = scalar_lea.vmem [#allocation4], 48
    %v1223 = vld [vmem:[%s1222] sm:$0xff]
    %v1224 = vmul.f32 %v1199, %v1176
    %v1225 = vadd.f32 %v1223, %v1224
    %v1226 = vtanh.pop %v1225
    %v1227 = vsub.f32 1.0, %v1221
    %v1228 = vmul.f32 %v1227, %v1226
    %v1229 = vmul.f32 %v1221, %v1114
    %v1230 = vadd.f32 %v1228, %v1229
    %vm1231 = vcmp.gt.s32.totalorder %v369, 6
    %v1232 = vsel %vm1231, 1, 0
    %1233 = vset.pattern.permute.xlu0 0
    %1234 = vperm.xlu0 %1233, %v1232
    %v1235 = vpop.permute.xlu0 %1234
    %vm1236 = vcmp.eq.s32.totalorder %v1235, 1
    %v1237 = vsel %vm1236, %v1230, %v1114
    %v1239 = vsel %vm252, %v1237, 0
    %1241 = vmatpush.msra.mxu0 0.0
    %1242 = vmatpush.msra.mxu0 0.0
    %1243 = vmatpush.msra.mxu0 0.0
    %1244 = vmatpush.msra.mxu0 0.0
    %1245 = vmatpush.msra.mxu0 0.0
    %1246 = vmatpush.msra.mxu0 0.0
    %1247 = vmatpush.msra.mxu0 0.0
    %1248 = vmatpush.msra.mxu0 0.0
    %1249 = vmatpush.msra.mxu0 0.0
    %1250 = vmatpush.msra.mxu0 0.0
    %1251 = vmatpush.msra.mxu0 0.0
    %1252 = vmatpush.msra.mxu0 0.0
    %1253 = vmatpush.msra.mxu0 0.0
    %1254 = vmatpush.msra.mxu0 0.0
    %1255 = vmatpush.msra.mxu0 %v371
    %1256 = vmatpush.msra.mxu0 %v370
    %1257 = vmatmul.f32.gmra.mxu0 %v1239
    %v1258 = vpop.f32.mrf.mxu0
    %v1259 = vadd.f32 0.0, %v1258
    %1260 = vdwg.mxu0
    %1261 = vmatpush.msra.mxu0 0.0
    %1262 = vmatpush.msra.mxu0 0.0
    %1263 = vmatpush.msra.mxu0 0.0
    %1264 = vmatpush.msra.mxu0 0.0
    %1265 = vmatpush.msra.mxu0 0.0
    %1266 = vmatpush.msra.mxu0 0.0
    %1267 = vmatpush.msra.mxu0 0.0
    %1268 = vmatpush.msra.mxu0 0.0
    %1269 = vmatpush.msra.mxu0 0.0
    %1270 = vmatpush.msra.mxu0 0.0
    %1271 = vmatpush.msra.mxu0 0.0
    %1272 = vmatpush.msra.mxu0 0.0
    %1273 = vmatpush.msra.mxu0 0.0
    %1274 = vmatpush.msra.mxu0 0.0
    %1275 = vmatpush.msra.mxu0 %v373
    %1276 = vmatpush.msra.mxu0 %v372
    %1277 = vmatmul.f32.gmra.mxu0 %v1239
    %v1278 = vpop.f32.mrf.mxu0
    %v1279 = vadd.f32 0.0, %v1278
    %1280 = vdwg.mxu0
    %1281 = vmatpush.msra.mxu0 0.0
    %1282 = vmatpush.msra.mxu0 0.0
    %1283 = vmatpush.msra.mxu0 0.0
    %1284 = vmatpush.msra.mxu0 0.0
    %1285 = vmatpush.msra.mxu0 0.0
    %1286 = vmatpush.msra.mxu0 0.0
    %1287 = vmatpush.msra.mxu0 0.0
    %1288 = vmatpush.msra.mxu0 0.0
    %1289 = vmatpush.msra.mxu0 0.0
    %1290 = vmatpush.msra.mxu0 0.0
    %1291 = vmatpush.msra.mxu0 0.0
    %1292 = vmatpush.msra.mxu0 0.0
    %1293 = vmatpush.msra.mxu0 0.0
    %1294 = vmatpush.msra.mxu0 0.0
    %1295 = vmatpush.msra.mxu0 %v375
    %1296 = vmatpush.msra.mxu0 %v374
    %1297 = vmatmul.f32.gmra.mxu0 %v1239
    %v1298 = vpop.f32.mrf.mxu0
    %v1299 = vadd.f32 %v421, %v1298
    %1300 = vdwg.mxu0
    %s1301 = scalar_lea.vmem [#allocation2], 56
    %v1302 = vld [vmem:[%s1301] sm:$0xff]
    %v1303 = vadd.f32 %v1302, %v1259
    %v1304 = vxor.u32 %v1303, 2147483648
    %v1305 = vmul.f32 %v1304, 1.442695
    %v1306 = vpow.pop %v1305
    %v1307 = vadd.f32 %v1306, 1.0
    %v1308 = vrcp.pop %v1307
    %v1309 = vmul.f32 %v1307, %v1308
    %v1310 = vsub.f32 1.0, %v1309
    %v1311 = vmul.f32 %v1308, %v1310
    %v1312 = vadd.f32 %v1308, %v1311
    %vm1313 = vweird.f32 %v1307
    %vm1314 = vweird.f32 %v1308
    %vm1315 = vmor %vm1313, %vm1314
    %v1316 = vsel %vm1315, %v1308, %v1312
    %v1317 = vand.u32 2147483647, %v1307
    %vm1318 = vcmp.eq.f32.partialorder %v1317, 8.507059e+37
    %v1319 = vand.u32 %v1307, 2147483648
    %v1320 = vor.u32 1.1754944e-38, %v1319
    %v1321 = vsel %vm1318, %v1320, %v1316
    %v1322 = vmul.f32 1.0, %v1321
    %s1323 = scalar_lea.vmem [#allocation3], 56
    %v1324 = vld [vmem:[%s1323] sm:$0xff]
    %v1325 = vadd.f32 %v1324, %v1279
    %v1326 = vxor.u32 %v1325, 2147483648
    %v1327 = vmul.f32 %v1326, 1.442695
    %v1328 = vpow.pop %v1327
    %v1329 = vadd.f32 %v1328, 1.0
    %v1330 = vrcp.pop %v1329
    %v1331 = vmul.f32 %v1329, %v1330
    %v1332 = vsub.f32 1.0, %v1331
    %v1333 = vmul.f32 %v1330, %v1332
    %v1334 = vadd.f32 %v1330, %v1333
    %vm1335 = vweird.f32 %v1329
    %vm1336 = vweird.f32 %v1330
    %vm1337 = vmor %vm1335, %vm1336
    %v1338 = vsel %vm1337, %v1330, %v1334
    %v1339 = vand.u32 2147483647, %v1329
    %vm1340 = vcmp.eq.f32.partialorder %v1339, 8.507059e+37
    %v1341 = vand.u32 %v1329, 2147483648
    %v1342 = vor.u32 1.1754944e-38, %v1341
    %v1343 = vsel %vm1340, %v1342, %v1338
    %v1344 = vmul.f32 1.0, %v1343
    %s1345 = scalar_lea.vmem [#allocation4], 56
    %v1346 = vld [vmem:[%s1345] sm:$0xff]
    %v1347 = vmul.f32 %v1322, %v1299
    %v1348 = vadd.f32 %v1346, %v1347
    %v1349 = vtanh.pop %v1348
    %v1350 = vsub.f32 1.0, %v1344
    %v1351 = vmul.f32 %v1350, %v1349
    %v1352 = vmul.f32 %v1344, %v1237
    %v1353 = vadd.f32 %v1351, %v1352
    %vm1354 = vcmp.gt.s32.totalorder %v369, 7
    %v1355 = vsel %vm1354, 1, 0
    %1356 = vset.pattern.permute.xlu0 0
    %1357 = vperm.xlu0 %1356, %v1355
    %v1358 = vpop.permute.xlu0 %1357
    %vm1359 = vcmp.eq.s32.totalorder %v1358, 1
    %v1360 = vsel %vm1359, %v1353, %v1237
    %v1361 = vld [vmem:[%s12] sm:$0xff]
    %v1362 = vld [vmem:[%s12 + $0x8] sm:$0xff]
    %v1363 = vld [vmem:[%s13] sm:$0x1]
    %v1365 = vperm.slane %v1363, 0
    %v1368 = vsel %vm252, %v1360, 0
    %1370 = vmatpush.msra.mxu0 0.0
    %1371 = vmatpush.msra.mxu0 0.0
    %1372 = vmatpush.msra.mxu0 0.0
    %1373 = vmatpush.msra.mxu0 0.0
    %1374 = vmatpush.msra.mxu0 0.0
    %1375 = vmatpush.msra.mxu0 0.0
    %1376 = vmatpush.msra.mxu0 0.0
    %1377 = vmatpush.msra.mxu0 0.0
    %1378 = vmatpush.msra.mxu0 0.0
    %1379 = vmatpush.msra.mxu0 0.0
    %1380 = vmatpush.msra.mxu0 0.0
    %1381 = vmatpush.msra.mxu0 0.0
    %1382 = vmatpush.msra.mxu0 0.0
    %1383 = vmatpush.msra.mxu0 0.0
    %1384 = vmatpush.msra.mxu0 %v1362
    %1385 = vmatpush.msra.mxu0 %v1361
    %1386 = vmatmul.f32.gmra.mxu0 %v1368
    %v1387 = vpop.f32.mrf.mxu0
    %v1388 = vadd.f32 %v1365, %v1387
    %1389 = vdwg.mxu0
    %v1390 = vtanh.pop %v1388
    %v1391 = vld [vmem:[#allocation17] sm:$0xff]
    %v1392 = vld [vmem:[#allocation17 + $0x8] sm:$0xff]
    %v1393 = vld [vmem:[#allocation17 + $0x10] sm:$0xf]
    %v1394 = vld [vmem:[%s15] sm:$0x1]
    %v1396 = vperm.slane %v1394, 0
    %vm1398 = vcmask 162816
    %v1400 = vsel %vm1398, %v1390, 0
    %vm1402 = vcmask 1043456
    %v1404 = vsel %vm1402, %v1393, 0
    %1406 = vmatpush.msra.mxu0 0.0
    %1407 = vmatpush.msra.mxu0 0.0
    %1408 = vmatpush.msra.mxu0 0.0
    %1409 = vmatpush.msra.mxu0 0.0
    %1410 = vmatpush.msra.mxu0 0.0
    %1411 = vmatpush.msra.mxu0 0.0
    %1412 = vmatpush.msra.mxu0 0.0
    %1413 = vmatpush.msra.mxu0 0.0
    %1414 = vmatpush.msra.mxu0 0.0
    %1415 = vmatpush.msra.mxu0 0.0
    %1416 = vmatpush.msra.mxu0 0.0
    %1417 = vmatpush.msra.mxu0 0.0
    %1418 = vmatpush.msra.mxu0 0.0
    %1419 = vmatpush.msra.mxu0 %v1404
    %1420 = vmatpush.msra.mxu0 %v1392
    %1421 = vmatpush.msra.mxu0 %v1391
    %1422 = vmatmul.f32.gmra.mxu0 %v1400
    %v1423 = vpop.f32.mrf.mxu0
    %v1424 = vadd.f32 %v1396, %v1423
    %1425 = vdwg.mxu0
    %1426 = vst [vmem:[#allocation19] sm:$0xff] %v1424
    // Predicated region
    $region98: #{tpu_custom_call.1} parent=1 // pred_check
      _
    $region99: #{tpu_custom_call.1} parent=1 // pred_check_branch
      %1428 = sbr.rel (0) target = $region101
    $region100: #{tpu_custom_call.1} parent=1 // pred_region
      %1430 = vsyncadd [#allocation7], 0
      %s1432 = sshll.u32 [#allocation19], 4
      %s1433 = int_to_ptr.vmem [resolvable:$true] %s1432
      %s1434 = sshll.u32 %s16, 4
      %s1435 = int_to_ptr.hbm [resolvable:$true] %s1434
      %1437 = dma.vmem_to_hbm [thread:$0]  %s1433, 128, %s1435, [#allocation7]
    $region101: #{tpu_custom_call.1} parent=1 // pred_fallthru
      _
    // Predicated region
    $region102: #{tpu_custom_call.1} parent=1 // pred_check
      _
    $region103: #{tpu_custom_call.1} parent=1 // pred_check_branch
      %1439 = sbr.rel (0) target = $region105
    $region104: #{tpu_custom_call.1} parent=1 // pred_region
      %1441 = dma.done [#allocation7], 128
    $region105: #{tpu_custom_call.1} parent=1 // pred_fallthru
      _
    %1442 = vsyncpa [#allocation6], 1
    %1443 = vsyncpa [#allocation9], 1
    %1444 = vsyncpa [#allocation12], 1
    %1445 = vsyncpa [#allocation15], 1
    %1446 = vsyncpa [#allocation18], 1
    %1447 = vsyncpa [#allocation7], 1

</llo_original>
